<compile_context>
chip_gen: v6e
topology: v6e:2x2x1
jax: 0.10.0
libtpu: 0.0.40
codegen_flags: <defaults>
</compile_context>

<pallas_src>
import jax
import jax.numpy as jnp
from jax import lax
from jax.experimental import pallas as pl
from jax.experimental.pallas import tpu as pltpu


def _pixel_shuffle_nchw(x, r):
    """PixelShuffle(r) on NCHW: (N, C*r*r, H, W) -> (N, C, H*r, W*r)."""
    N, C, H, W = x.shape
    co = C // (r * r)
    x = x.reshape(N, co, r, r, H, W)
    x = jnp.transpose(x, (0, 1, 4, 2, 5, 3))
    return x.reshape(N, co, H * r, W * r)


def _make_kernel(C, Wp, S1, S2, S2p, O1, Y_OFF, Sy, offs):
    C2 = 2 * C
    O2 = Y_OFF + Wp  # flat offset of the owned output rows inside y_ref

    def kernel(x_ref, m_ref, w1_ref, b1_ref, a1_ref, w2_ref, b2_ref, a2_ref,
               o_ref, y_ref, im_ref):
        # x_ref : (1, 1, C, Sx)   row band of padded x (3 halo rows each side), flat
        # m_ref : (1, 1, S1)      out1 validity mask for this band (f32 0/1)
        # w1_ref: (C, 9C)  conv1 weights, tap-major  [co, t*C + ci]
        # w2_ref: (C2, 9C) conv2 weights, tap-major
        # o_ref : (1, 1, C2, S2p) owned conv2+PReLU output rows (lane-padded)
        # y_ref : VMEM (C, Sy)    out1 band staged at lane offset Y_OFF (persistent)
        # im_ref: VMEM (9C, S1)   im2col staging, reused by both convs

        # One-time hygiene: zero y_ref's margin lanes. They are never rewritten and
        # can never reach a kept output (only cropped halo positions read them).
        @pl.when(jnp.logical_and(pl.program_id(0) == 0, pl.program_id(1) == 0))
        def _zero_margins():
            y_ref[:, pl.ds(0, Y_OFF)] = jnp.zeros((C, Y_OFF), jnp.float32)
            y_ref[:, pl.ds(Y_OFF + S1, Sy - Y_OFF - S1)] = jnp.zeros(
                (C, Sy - Y_OFF - S1), jnp.float32)

        # ---- conv1 (3x3, C->C): stage 9 shifted windows, ONE K=9C MXU matmul ----
        for t, d in enumerate(offs):
            im_ref[pl.ds(t * C, C), :] = (
                x_ref[0, 0, :, pl.ds(O1 + d, S1)].astype(jnp.float32))
        acc1 = jnp.dot(w1_ref[...], im_ref[...],
                       preferred_element_type=jnp.float32) + b1_ref[...]

        # PReLU(C) + residual, then zero the padded-grid halo ring so conv2 sees
        # proper zero padding.
        xc = x_ref[0, 0, :, pl.ds(O1, S1)].astype(jnp.float32)
        out1 = (jnp.where(acc1 > 0, acc1, a1_ref[...] * acc1) + xc) * m_ref[0, :, :]
        y_ref[:, pl.ds(Y_OFF, S1)] = out1

        # ---- conv2 (3x3, C->2C): im2col over out1, ONE K=9C MXU matmul ----
        for t, d in enumerate(offs):
            im_ref[pl.ds(t * C, C), pl.ds(0, S2)] = y_ref[:, pl.ds(O2 + d, S2)]
        acc2 = jnp.dot(w2_ref[...], im_ref[:, pl.ds(0, S2)],
                       preferred_element_type=jnp.float32)

        # torch.cat((out1, out1), 1) shortcut: exact sublane concat-add (no MXU tap).
        sc = y_ref[:, pl.ds(O2, S2)]
        z = acc2 + b2_ref[...] + jnp.concatenate([sc, sc], axis=0)

        # ---- PReLU(2C), lane-pad to S2p so the store is a full-width vst ----
        out2 = jnp.where(z > 0, z, a2_ref[...] * z)
        if S2p > S2:
            out2 = jnp.concatenate(
                [out2, jnp.zeros((C2, S2p - S2), jnp.float32)], axis=-1)
        o_ref[0, 0, :, :] = out2.astype(o_ref.dtype)

    return kernel


def realblock_thick_transpose_forward(x, snr, w1, b1, a1, w2, b2, a2, *,
                                      planes=None, stride=1, rows_per_band=None):
    """Pallas implementation of RealBlock_thick_transpose(inplanes, planes).forward(x, snr)."""
    del snr                      # snr is accepted but unused by the PyTorch forward
    assert stride == 1           # TODO(synk): stride != 1 not implemented
    N, C, H, W = x.shape
    C2 = 2 * C
    assert C2 % 4 == 0, "PixelShuffle(2) needs 2*inplanes divisible by 4"
    if planes is not None:
        assert C2 // 4 == planes, "module asserts out.shape[1] == planes"

    Hp, Wp = H + 2, W + 2
    HALO = 3

    # --- pick the row-band height (bounds VMEM regardless of image size) ---
    if rows_per_band is None:
        budget = 24 << 20                       # ~24 MiB working set per step (v7x safe)
        per_row = 4 * Wp * (16 * C + 1)         # crude f32 bytes per padded-grid row
        rows_per_band = max(4, budget // per_row)
    Rb = int(min(int(rows_per_band), Hp))
    nb = -(-Hp // Rb)
    Hq = nb * Rb

    Rx = Rb + 2 * HALO
    Sx = Rx * Wp                    # x band flat size
    S1 = (Rb + 2) * Wp              # out1 rows (owned +/-1) flat size
    S2 = Rb * Wp                    # owned output rows flat size
    S2p = -(-S2 // 128) * 128       # lane-dense (128-multiple) output width
    O1 = 2 * Wp                     # flat offset of out1 row 0 inside the x band
    Y_OFF = 128                     # lane-aligned offset of out1 inside the y scratch
    Sy = Y_OFF + S1 + 128

    offs = [dy * Wp + dx for dy in (-1, 0, 1) for dx in (-1, 0, 1)]

    # --- wrapper-side layout prep ---
    # Globally zero-padded image: 1px conv halo on W; on H the conv halo plus the
    # band round-up plus HALO rows so every band slice (with halos) is in-bounds.
    xg = jnp.pad(x, ((0, 0), (0, 0), (HALO + 1, HALO + 1 + (Hq - Hp)), (1, 1)))
    x_bands = jnp.stack([xg[:, :, r * Rb:r * Rb + Rx, :] for r in range(nb)],
                        axis=1).reshape(N, nb, C, Sx)

    # im2col weight layout: (Cout, 9*Cin), tap-major, matching `offs` ordering.
    w1cat = jnp.transpose(w1, (0, 2, 3, 1)).reshape(C, 9 * C).astype(jnp.float32)
    w2cat = jnp.transpose(w2, (0, 2, 3, 1)).reshape(C2, 9 * C).astype(jnp.float32)
    b1c = b1.reshape(C, 1).astype(jnp.float32)
    a1c = a1.reshape(C, 1).astype(jnp.float32)
    b2c = b2.reshape(C2, 1).astype(jnp.float32)
    a2c = a2.reshape(C2, 1).astype(jnp.float32)

    # Per-band out1 validity mask: 1 inside the real HxW interior, 0 on the
    # padded-grid halo ring and on band round-up rows.
    gy = (jnp.arange(nb)[:, None, None] * Rb - 1) + jnp.arange(Rb + 2)[None, :, None]
    gx = jnp.arange(Wp)[None, None, :]
    mask = ((gy >= 1) & (gy <= H) & (gx >= 1) & (gx <= W)).astype(jnp.float32)
    mask = mask.reshape(nb, 1, S1)

    kernel = _make_kernel(C, Wp, S1, S2, S2p, O1, Y_OFF, Sy, offs)

    # explicit VMEM budget: double-buffered blocks + persistent scratch + slack
    block_bytes = 4 * (C * Sx + S1 + C2 * S2p)
    scratch_bytes = 4 * (C * Sy + 9 * C * S1)
    vmem_limit = int(min(2 * block_bytes + scratch_bytes + (8 << 20), 48 << 20))

    flops = 2 * N * nb * 9 * C * (C * S1 + C2 * S2)
    bytes_accessed = 4 * (x_bands.size + mask.size + w1cat.size + w2cat.size
                          + b1c.size + a1c.size + b2c.size + a2c.size
                          + N * nb * C2 * S2p)

    y = pl.pallas_call(
        kernel,
        out_shape=jax.ShapeDtypeStruct((N, nb, C2, S2p), x.dtype),
        grid_spec=pltpu.PrefetchScalarGridSpec(
            num_scalar_prefetch=0,
            grid=(N, nb),
            in_specs=[
                pl.BlockSpec((1, 1, C, Sx), lambda b, r: (b, r, 0, 0)),   # x band
                pl.BlockSpec((1, 1, S1), lambda b, r: (r, 0, 0)),         # out1 mask
                pl.BlockSpec((C, 9 * C), lambda b, r: (0, 0)),            # conv1 W
                pl.BlockSpec((C, 1), lambda b, r: (0, 0)),                # bias1
                pl.BlockSpec((C, 1), lambda b, r: (0, 0)),                # prelu1 alpha
                pl.BlockSpec((C2, 9 * C), lambda b, r: (0, 0)),           # conv2 W
                pl.BlockSpec((C2, 1), lambda b, r: (0, 0)),               # bias2
                pl.BlockSpec((C2, 1), lambda b, r: (0, 0)),               # prelu4 alpha
            ],
            out_specs=pl.BlockSpec((1, 1, C2, S2p), lambda b, r: (b, r, 0, 0)),
            scratch_shapes=[pltpu.VMEM((C, Sy), jnp.float32),
                            pltpu.VMEM((9 * C, S1), jnp.float32)],
        ),
        compiler_params=pltpu.CompilerParams(
            dimension_semantics=("parallel", "parallel"),
            vmem_limit_bytes=vmem_limit),
        cost_estimate=pl.CostEstimate(flops=flops, transcendentals=0,
                                      bytes_accessed=bytes_accessed),
    )(x_bands, mask, w1cat, b1c, a1c, w2cat, b2c, a2c)

    # wrapper-side layout finish: drop lane pad, re-stack bands into rows,
    # crop the 1px conv halo, PixelShuffle(2).
    y = y[..., :S2].reshape(N, nb, C2, Rb, Wp)
    y = jnp.transpose(y, (0, 2, 1, 3, 4)).reshape(N, C2, Hq, Wp)
    y = y[:, :, 1:H + 1, 1:W + 1]
    return _pixel_shuffle_nchw(y, 2)


def realblock_thick_transpose_ref(x, w1, b1, a1, w2, b2, a2):
    """Pure-JAX reference mirroring the PyTorch forward (stride=1)."""
    def conv3x3(v, w, b):
        out = lax.conv_general_dilated(
            v, w, window_strides=(1, 1), padding=((1, 1), (1, 1)),
            dimension_numbers=("NCHW", "OIHW", "NCHW"),
            precision=lax.Precision.HIGHEST)
        return out + b[None, :, None, None]

    def prelu(v, a):
        return jnp.where(v > 0, v, a[None, :, None, None] * v)

    out = prelu(conv3x3(x, w1, b1), a1) + x
    xr = out
    out = conv3x3(out, w2, b2) + jnp.concatenate([xr, xr], axis=1)
    out = prelu(out, a2)
    return _pixel_shuffle_nchw(out, 2)


if __name__ == "__main__":
    inplanes = 4
    planes = (2 * inplanes) // 4          # PixelShuffle(2) of 2*inplanes channels
    N, H, W = 2, 16, 16

    key = jax.random.PRNGKey(0)
    ks = jax.random.split(key, 7)
    x = jax.random.normal(ks[0], (N, inplanes, H, W), dtype=jnp.float32)
    w1 = 0.2 * jax.random.normal(ks[1], (inplanes, inplanes, 3, 3), jnp.float32)
    b1 = 0.1 * jax.random.normal(ks[2], (inplanes,), jnp.float32)
    a1 = 0.25 + 0.1 * jax.random.normal(ks[3], (inplanes,), jnp.float32)
    w2 = 0.2 * jax.random.normal(ks[4], (2 * inplanes, inplanes, 3, 3), jnp.float32)
    b2 = 0.1 * jax.random.normal(ks[5], (2 * inplanes,), jnp.float32)
    a2 = 0.25 + 0.1 * jax.random.normal(ks[6], (2 * inplanes,), jnp.float32)
    snr = jnp.float32(10.0)               # unused by the forward, kept for signature parity

    ref = realblock_thick_transpose_ref(x, w1, b1, a1, w2, b2, a2)

    # Exercise both the single-band (whole image) and the multi-band
    # (spatial row tiling) paths.
    for rpb in (None, 6):
        out = jax.block_until_ready(
            realblock_thick_transpose_forward(x, snr, w1, b1, a1, w2, b2, a2,
                                              planes=planes, rows_per_band=rpb))
        assert out.shape == ref.shape == (N, planes, 2 * H, 2 * W), (out.shape, ref.shape)
        err = float(jnp.max(jnp.abs(out - ref)))
        assert jnp.allclose(out, ref, atol=5e-3, rtol=5e-3), (rpb, err)

    print("KERNEL_OK")
</pallas_src>

<mosaic_0001>
module attributes {stable_mosaic.version = 11 : i64} {
  func.func @kernel(%arg0: i32, %arg1: i32, %arg2: memref<1x1x4x432xf32, #tpu.memory_space<vmem>>, %arg3: memref<1x1x360xf32, #tpu.memory_space<vmem>>, %arg4: memref<4x36xf32, #tpu.memory_space<vmem>>, %arg5: memref<4x1xf32, #tpu.memory_space<vmem>>, %arg6: memref<4x1xf32, #tpu.memory_space<vmem>>, %arg7: memref<8x36xf32, #tpu.memory_space<vmem>>, %arg8: memref<8x1xf32, #tpu.memory_space<vmem>>, %arg9: memref<8x1xf32, #tpu.memory_space<vmem>>, %arg10: memref<1x1x8x384xf32, #tpu.memory_space<vmem>>, %arg11: memref<4x616xf32, #tpu.memory_space<vmem>>, %arg12: memref<36x360xf32, #tpu.memory_space<vmem>>) attributes {dimension_semantics = [#tpu.dimension_semantics<parallel>, #tpu.dimension_semantics<parallel>], iteration_bounds = array<i64: 2, 1>, scalar_prefetch = 0 : i64, scratch_operands = 2 : i64, tpu.core_type = #tpu.core_type<tc>, window_params = [{transform_indices = @transform_0, window_bounds = array<i64: 1, 1, 4, 432>}, {transform_indices = @transform_1, window_bounds = array<i64: 1, 1, 360>}, {pipeline_mode = #tpu.pipeline_mode<synchronous>, transform_indices = @transform_2, window_bounds = array<i64: 4, 36>}, {pipeline_mode = #tpu.pipeline_mode<synchronous>, transform_indices = @transform_3, window_bounds = array<i64: 4, 1>}, {pipeline_mode = #tpu.pipeline_mode<synchronous>, transform_indices = @transform_4, window_bounds = array<i64: 4, 1>}, {pipeline_mode = #tpu.pipeline_mode<synchronous>, transform_indices = @transform_5, window_bounds = array<i64: 8, 36>}, {pipeline_mode = #tpu.pipeline_mode<synchronous>, transform_indices = @transform_6, window_bounds = array<i64: 8, 1>}, {pipeline_mode = #tpu.pipeline_mode<synchronous>, transform_indices = @transform_7, window_bounds = array<i64: 8, 1>}, {transform_indices = @transform_8, window_bounds = array<i64: 1, 1, 8, 384>}]} {
    %c0_i32 = arith.constant 0 : i32
    %0 = arith.cmpi eq, %arg0, %c0_i32 : i32
    %c0_i32_0 = arith.constant 0 : i32
    %1 = arith.cmpi eq, %arg1, %c0_i32_0 : i32
    %2 = arith.andi %0, %1 : i1
    %3 = arith.extui %2 : i1 to i32
    %c0_i32_1 = arith.constant 0 : i32
    %4 = arith.cmpi ne, %3, %c0_i32_1 : i32
    scf.if %4 {
      %cst_100 = arith.constant 0.000000e+00 : f32
      %90 = vector.broadcast %cst_100 : f32 to vector<4x128xf32>
      %c0_101 = arith.constant 0 : index
      %c0_102 = arith.constant 0 : index
      %91 = vector.load %arg11[%c0_101, %c0_102] : memref<4x616xf32, #tpu.memory_space<vmem>>, vector<4x128xf32>
      tpu.vector_store %arg11[%c0_101, %c0_102], %90 {strides = array<i32>} : memref<4x616xf32, #tpu.memory_space<vmem>>, vector<4x128xf32>,
      %cst_103 = arith.constant 0.000000e+00 : f32
      %92 = vector.broadcast %cst_103 : f32 to vector<4x128xf32>
      %c0_104 = arith.constant 0 : index
      %c488 = arith.constant 488 : index
      %93 = vector.load %arg11[%c0_104, %c488] : memref<4x616xf32, #tpu.memory_space<vmem>>, vector<4x128xf32>
      tpu.vector_store %arg11[%c0_104, %c488], %92 {strides = array<i32>} : memref<4x616xf32, #tpu.memory_space<vmem>>, vector<4x128xf32>,
    } else {
    }
    %c0 = arith.constant 0 : index
    %c0_2 = arith.constant 0 : index
    %c0_3 = arith.constant 0 : index
    %c17 = arith.constant 17 : index
    %5 = vector.load %arg2[%c0, %c0_2, %c0_3, %c17] : memref<1x1x4x432xf32, #tpu.memory_space<vmem>>, vector<1x1x4x360xf32>
    %6 = vector.shape_cast %5 : vector<1x1x4x360xf32> to vector<4x360xf32>
    %c0_4 = arith.constant 0 : index
    %c0_5 = arith.constant 0 : index
    %7 = vector.load %arg12[%c0_4, %c0_5] : memref<36x360xf32, #tpu.memory_space<vmem>>, vector<4x360xf32>
    tpu.vector_store %arg12[%c0_4, %c0_5], %6 {strides = array<i32>} : memref<36x360xf32, #tpu.memory_space<vmem>>, vector<4x360xf32>,
    %c0_6 = arith.constant 0 : index
    %c0_7 = arith.constant 0 : index
    %c0_8 = arith.constant 0 : index
    %c18 = arith.constant 18 : index
    %8 = vector.load %arg2[%c0_6, %c0_7, %c0_8, %c18] : memref<1x1x4x432xf32, #tpu.memory_space<vmem>>, vector<1x1x4x360xf32>
    %9 = vector.shape_cast %8 : vector<1x1x4x360xf32> to vector<4x360xf32>
    %c4 = arith.constant 4 : index
    %c0_9 = arith.constant 0 : index
    %10 = vector.load %arg12[%c4, %c0_9] : memref<36x360xf32, #tpu.memory_space<vmem>>, vector<4x360xf32>
    tpu.vector_store %arg12[%c4, %c0_9], %9 {strides = array<i32>} : memref<36x360xf32, #tpu.memory_space<vmem>>, vector<4x360xf32>,
    %c0_10 = arith.constant 0 : index
    %c0_11 = arith.constant 0 : index
    %c0_12 = arith.constant 0 : index
    %c19 = arith.constant 19 : index
    %11 = vector.load %arg2[%c0_10, %c0_11, %c0_12, %c19] : memref<1x1x4x432xf32, #tpu.memory_space<vmem>>, vector<1x1x4x360xf32>
    %12 = vector.shape_cast %11 : vector<1x1x4x360xf32> to vector<4x360xf32>
    %c8 = arith.constant 8 : index
    %c0_13 = arith.constant 0 : index
    %13 = vector.load %arg12[%c8, %c0_13] : memref<36x360xf32, #tpu.memory_space<vmem>>, vector<4x360xf32>
    tpu.vector_store %arg12[%c8, %c0_13], %12 {strides = array<i32>} : memref<36x360xf32, #tpu.memory_space<vmem>>, vector<4x360xf32>,
    %c0_14 = arith.constant 0 : index
    %c0_15 = arith.constant 0 : index
    %c0_16 = arith.constant 0 : index
    %c35 = arith.constant 35 : index
    %14 = vector.load %arg2[%c0_14, %c0_15, %c0_16, %c35] : memref<1x1x4x432xf32, #tpu.memory_space<vmem>>, vector<1x1x4x360xf32>
    %15 = vector.shape_cast %14 : vector<1x1x4x360xf32> to vector<4x360xf32>
    %c12 = arith.constant 12 : index
    %c0_17 = arith.constant 0 : index
    %16 = vector.load %arg12[%c12, %c0_17] : memref<36x360xf32, #tpu.memory_space<vmem>>, vector<4x360xf32>
    tpu.vector_store %arg12[%c12, %c0_17], %15 {strides = array<i32>} : memref<36x360xf32, #tpu.memory_space<vmem>>, vector<4x360xf32>,
    %c0_18 = arith.constant 0 : index
    %c0_19 = arith.constant 0 : index
    %c0_20 = arith.constant 0 : index
    %c36 = arith.constant 36 : index
    %17 = vector.load %arg2[%c0_18, %c0_19, %c0_20, %c36] : memref<1x1x4x432xf32, #tpu.memory_space<vmem>>, vector<1x1x4x360xf32>
    %18 = vector.shape_cast %17 : vector<1x1x4x360xf32> to vector<4x360xf32>
    %c16 = arith.constant 16 : index
    %c0_21 = arith.constant 0 : index
    %19 = vector.load %arg12[%c16, %c0_21] : memref<36x360xf32, #tpu.memory_space<vmem>>, vector<4x360xf32>
    tpu.vector_store %arg12[%c16, %c0_21], %18 {strides = array<i32>} : memref<36x360xf32, #tpu.memory_space<vmem>>, vector<4x360xf32>,
    %c0_22 = arith.constant 0 : index
    %c0_23 = arith.constant 0 : index
    %c0_24 = arith.constant 0 : index
    %c37 = arith.constant 37 : index
    %20 = vector.load %arg2[%c0_22, %c0_23, %c0_24, %c37] : memref<1x1x4x432xf32, #tpu.memory_space<vmem>>, vector<1x1x4x360xf32>
    %21 = vector.shape_cast %20 : vector<1x1x4x360xf32> to vector<4x360xf32>
    %c20 = arith.constant 20 : index
    %c0_25 = arith.constant 0 : index
    %22 = vector.load %arg12[%c20, %c0_25] : memref<36x360xf32, #tpu.memory_space<vmem>>, vector<4x360xf32>
    tpu.vector_store %arg12[%c20, %c0_25], %21 {strides = array<i32>} : memref<36x360xf32, #tpu.memory_space<vmem>>, vector<4x360xf32>,
    %c0_26 = arith.constant 0 : index
    %c0_27 = arith.constant 0 : index
    %c0_28 = arith.constant 0 : index
    %c53 = arith.constant 53 : index
    %23 = vector.load %arg2[%c0_26, %c0_27, %c0_28, %c53] : memref<1x1x4x432xf32, #tpu.memory_space<vmem>>, vector<1x1x4x360xf32>
    %24 = vector.shape_cast %23 : vector<1x1x4x360xf32> to vector<4x360xf32>
    %c24 = arith.constant 24 : index
    %c0_29 = arith.constant 0 : index
    %25 = vector.load %arg12[%c24, %c0_29] : memref<36x360xf32, #tpu.memory_space<vmem>>, vector<4x360xf32>
    tpu.vector_store %arg12[%c24, %c0_29], %24 {strides = array<i32>} : memref<36x360xf32, #tpu.memory_space<vmem>>, vector<4x360xf32>,
    %c0_30 = arith.constant 0 : index
    %c0_31 = arith.constant 0 : index
    %c0_32 = arith.constant 0 : index
    %c54 = arith.constant 54 : index
    %26 = vector.load %arg2[%c0_30, %c0_31, %c0_32, %c54] : memref<1x1x4x432xf32, #tpu.memory_space<vmem>>, vector<1x1x4x360xf32>
    %27 = vector.shape_cast %26 : vector<1x1x4x360xf32> to vector<4x360xf32>
    %c28 = arith.constant 28 : index
    %c0_33 = arith.constant 0 : index
    %28 = vector.load %arg12[%c28, %c0_33] : memref<36x360xf32, #tpu.memory_space<vmem>>, vector<4x360xf32>
    tpu.vector_store %arg12[%c28, %c0_33], %27 {strides = array<i32>} : memref<36x360xf32, #tpu.memory_space<vmem>>, vector<4x360xf32>,
    %c0_34 = arith.constant 0 : index
    %c0_35 = arith.constant 0 : index
    %c0_36 = arith.constant 0 : index
    %c55 = arith.constant 55 : index
    %29 = vector.load %arg2[%c0_34, %c0_35, %c0_36, %c55] : memref<1x1x4x432xf32, #tpu.memory_space<vmem>>, vector<1x1x4x360xf32>
    %30 = vector.shape_cast %29 : vector<1x1x4x360xf32> to vector<4x360xf32>
    %c32 = arith.constant 32 : index
    %c0_37 = arith.constant 0 : index
    %31 = vector.load %arg12[%c32, %c0_37] : memref<36x360xf32, #tpu.memory_space<vmem>>, vector<4x360xf32>
    tpu.vector_store %arg12[%c32, %c0_37], %30 {strides = array<i32>} : memref<36x360xf32, #tpu.memory_space<vmem>>, vector<4x360xf32>,
    %c0_38 = arith.constant 0 : index
    %c0_39 = arith.constant 0 : index
    %32 = vector.load %arg4[%c0_38, %c0_39] : memref<4x36xf32, #tpu.memory_space<vmem>>, vector<4x36xf32>
    %c0_40 = arith.constant 0 : index
    %c0_41 = arith.constant 0 : index
    %33 = vector.load %arg12[%c0_40, %c0_41] : memref<36x360xf32, #tpu.memory_space<vmem>>, vector<36x360xf32>
    %cst = arith.constant dense<0.000000e+00> : vector<4x360xf32>
    %34 = tpu.matmul %32, %33, %cst {dimension_numbers = #tpu.dot_dimension_numbers<[1], [0], [0], [1], [0, 0, 1, 1], [], []>} : vector<4x36xf32>, vector<36x360xf32>, vector<4x360xf32> -> vector<4x360xf32>
    %c0_42 = arith.constant 0 : index
    %c0_43 = arith.constant 0 : index
    %35 = vector.load %arg5[%c0_42, %c0_43] : memref<4x1xf32, #tpu.memory_space<vmem>>, vector<4x1xf32>
    %36 = vector.broadcast %35 : vector<4x1xf32> to vector<4x360xf32>
    %37 = arith.addf %34, %36 : vector<4x360xf32>
    %c0_44 = arith.constant 0 : index
    %c0_45 = arith.constant 0 : index
    %c0_46 = arith.constant 0 : index
    %c36_47 = arith.constant 36 : index
    %38 = vector.load %arg2[%c0_44, %c0_45, %c0_46, %c36_47] : memref<1x1x4x432xf32, #tpu.memory_space<vmem>>, vector<1x1x4x360xf32>
    %39 = vector.shape_cast %38 : vector<1x1x4x360xf32> to vector<4x360xf32>
    %cst_48 = arith.constant 0.000000e+00 : f32
    %40 = vector.broadcast %cst_48 : f32 to vector<4x360xf32>
    %41 = arith.cmpf ogt, %37, %40 : vector<4x360xf32>
    %c0_49 = arith.constant 0 : index
    %c0_50 = arith.constant 0 : index
    %42 = vector.load %arg6[%c0_49, %c0_50] : memref<4x1xf32, #tpu.memory_space<vmem>>, vector<4x1xf32>
    %43 = vector.broadcast %42 : vector<4x1xf32> to vector<4x360xf32>
    %44 = arith.mulf %43, %37 : vector<4x360xf32>
    %45 = arith.select %41, %37, %44 : vector<4x360xi1>, vector<4x360xf32>
    %46 = arith.addf %45, %39 : vector<4x360xf32>
    %c0_51 = arith.constant 0 : index
    %c0_52 = arith.constant 0 : index
    %c0_53 = arith.constant 0 : index
    %47 = vector.load %arg3[%c0_51, %c0_52, %c0_53] : memref<1x1x360xf32, #tpu.memory_space<vmem>>, vector<1x1x360xf32>
    %48 = vector.shape_cast %47 : vector<1x1x360xf32> to vector<1x360xf32>
    %49 = vector.broadcast %48 : vector<1x360xf32> to vector<4x360xf32>
    %50 = arith.mulf %46, %49 : vector<4x360xf32>
    %c0_54 = arith.constant 0 : index
    %c128 = arith.constant 128 : index
    %51 = vector.load %arg11[%c0_54, %c128] : memref<4x616xf32, #tpu.memory_space<vmem>>, vector<4x360xf32>
    tpu.vector_store %arg11[%c0_54, %c128], %50 {strides = array<i32>} : memref<4x616xf32, #tpu.memory_space<vmem>>, vector<4x360xf32>,
    %c0_55 = arith.constant 0 : index
    %c127 = arith.constant 127 : index
    %52 = vector.load %arg11[%c0_55, %c127] : memref<4x616xf32, #tpu.memory_space<vmem>>, vector<4x324xf32>
    %c0_56 = arith.constant 0 : index
    %c0_57 = arith.constant 0 : index
    %53 = vector.load %arg12[%c0_56, %c0_57] : memref<36x360xf32, #tpu.memory_space<vmem>>, vector<4x324xf32>
    tpu.vector_store %arg12[%c0_56, %c0_57], %52 {strides = array<i32>} : memref<36x360xf32, #tpu.memory_space<vmem>>, vector<4x324xf32>,
    %c0_58 = arith.constant 0 : index
    %c128_59 = arith.constant 128 : index
    %54 = vector.load %arg11[%c0_58, %c128_59] : memref<4x616xf32, #tpu.memory_space<vmem>>, vector<4x324xf32>
    %c4_60 = arith.constant 4 : index
    %c0_61 = arith.constant 0 : index
    %55 = vector.load %arg12[%c4_60, %c0_61] : memref<36x360xf32, #tpu.memory_space<vmem>>, vector<4x324xf32>
    tpu.vector_store %arg12[%c4_60, %c0_61], %54 {strides = array<i32>} : memref<36x360xf32, #tpu.memory_space<vmem>>, vector<4x324xf32>,
    %c0_62 = arith.constant 0 : index
    %c129 = arith.constant 129 : index
    %56 = vector.load %arg11[%c0_62, %c129] : memref<4x616xf32, #tpu.memory_space<vmem>>, vector<4x324xf32>
    %c8_63 = arith.constant 8 : index
    %c0_64 = arith.constant 0 : index
    %57 = vector.load %arg12[%c8_63, %c0_64] : memref<36x360xf32, #tpu.memory_space<vmem>>, vector<4x324xf32>
    tpu.vector_store %arg12[%c8_63, %c0_64], %56 {strides = array<i32>} : memref<36x360xf32, #tpu.memory_space<vmem>>, vector<4x324xf32>,
    %c0_65 = arith.constant 0 : index
    %c145 = arith.constant 145 : index
    %58 = vector.load %arg11[%c0_65, %c145] : memref<4x616xf32, #tpu.memory_space<vmem>>, vector<4x324xf32>
    %c12_66 = arith.constant 12 : index
    %c0_67 = arith.constant 0 : index
    %59 = vector.load %arg12[%c12_66, %c0_67] : memref<36x360xf32, #tpu.memory_space<vmem>>, vector<4x324xf32>
    tpu.vector_store %arg12[%c12_66, %c0_67], %58 {strides = array<i32>} : memref<36x360xf32, #tpu.memory_space<vmem>>, vector<4x324xf32>,
    %c0_68 = arith.constant 0 : index
    %c146 = arith.constant 146 : index
    %60 = vector.load %arg11[%c0_68, %c146] : memref<4x616xf32, #tpu.memory_space<vmem>>, vector<4x324xf32>
    %c16_69 = arith.constant 16 : index
    %c0_70 = arith.constant 0 : index
    %61 = vector.load %arg12[%c16_69, %c0_70] : memref<36x360xf32, #tpu.memory_space<vmem>>, vector<4x324xf32>
    tpu.vector_store %arg12[%c16_69, %c0_70], %60 {strides = array<i32>} : memref<36x360xf32, #tpu.memory_space<vmem>>, vector<4x324xf32>,
    %c0_71 = arith.constant 0 : index
    %c147 = arith.constant 147 : index
    %62 = vector.load %arg11[%c0_71, %c147] : memref<4x616xf32, #tpu.memory_space<vmem>>, vector<4x324xf32>
    %c20_72 = arith.constant 20 : index
    %c0_73 = arith.constant 0 : index
    %63 = vector.load %arg12[%c20_72, %c0_73] : memref<36x360xf32, #tpu.memory_space<vmem>>, vector<4x324xf32>
    tpu.vector_store %arg12[%c20_72, %c0_73], %62 {strides = array<i32>} : memref<36x360xf32, #tpu.memory_space<vmem>>, vector<4x324xf32>,
    %c0_74 = arith.constant 0 : index
    %c163 = arith.constant 163 : index
    %64 = vector.load %arg11[%c0_74, %c163] : memref<4x616xf32, #tpu.memory_space<vmem>>, vector<4x324xf32>
    %c24_75 = arith.constant 24 : index
    %c0_76 = arith.constant 0 : index
    %65 = vector.load %arg12[%c24_75, %c0_76] : memref<36x360xf32, #tpu.memory_space<vmem>>, vector<4x324xf32>
    tpu.vector_store %arg12[%c24_75, %c0_76], %64 {strides = array<i32>} : memref<36x360xf32, #tpu.memory_space<vmem>>, vector<4x324xf32>,
    %c0_77 = arith.constant 0 : index
    %c164 = arith.constant 164 : index
    %66 = vector.load %arg11[%c0_77, %c164] : memref<4x616xf32, #tpu.memory_space<vmem>>, vector<4x324xf32>
    %c28_78 = arith.constant 28 : index
    %c0_79 = arith.constant 0 : index
    %67 = vector.load %arg12[%c28_78, %c0_79] : memref<36x360xf32, #tpu.memory_space<vmem>>, vector<4x324xf32>
    tpu.vector_store %arg12[%c28_78, %c0_79], %66 {strides = array<i32>} : memref<36x360xf32, #tpu.memory_space<vmem>>, vector<4x324xf32>,
    %c0_80 = arith.constant 0 : index
    %c165 = arith.constant 165 : index
    %68 = vector.load %arg11[%c0_80, %c165] : memref<4x616xf32, #tpu.memory_space<vmem>>, vector<4x324xf32>
    %c32_81 = arith.constant 32 : index
    %c0_82 = arith.constant 0 : index
    %69 = vector.load %arg12[%c32_81, %c0_82] : memref<36x360xf32, #tpu.memory_space<vmem>>, vector<4x324xf32>
    tpu.vector_store %arg12[%c32_81, %c0_82], %68 {strides = array<i32>} : memref<36x360xf32, #tpu.memory_space<vmem>>, vector<4x324xf32>,
    %c0_83 = arith.constant 0 : index
    %c0_84 = arith.constant 0 : index
    %70 = vector.load %arg7[%c0_83, %c0_84] : memref<8x36xf32, #tpu.memory_space<vmem>>, vector<8x36xf32>
    %c0_85 = arith.constant 0 : index
    %c0_86 = arith.constant 0 : index
    %71 = vector.load %arg12[%c0_85, %c0_86] : memref<36x360xf32, #tpu.memory_space<vmem>>, vector<36x324xf32>
    %cst_87 = arith.constant dense<0.000000e+00> : vector<8x324xf32>
    %72 = tpu.matmul %70, %71, %cst_87 {dimension_numbers = #tpu.dot_dimension_numbers<[1], [0], [0], [1], [0, 0, 1, 1], [], []>} : vector<8x36xf32>, vector<36x324xf32>, vector<8x324xf32> -> vector<8x324xf32>
    %c0_88 = arith.constant 0 : index
    %c146_89 = arith.constant 146 : index
    %73 = vector.load %arg11[%c0_88, %c146_89] : memref<4x616xf32, #tpu.memory_space<vmem>>, vector<4x324xf32>
    %c0_90 = arith.constant 0 : index
    %c0_91 = arith.constant 0 : index
    %74 = vector.load %arg8[%c0_90, %c0_91] : memref<8x1xf32, #tpu.memory_space<vmem>>, vector<8x1xf32>
    %75 = vector.broadcast %74 : vector<8x1xf32> to vector<8x324xf32>
    %76 = arith.addf %72, %75 : vector<8x324xf32>
    %77 = tpu.concatenate %73, %73 in 0 : vector<4x324xf32>, vector<4x324xf32> -> vector<8x324xf32>
    %78 = arith.addf %76, %77 : vector<8x324xf32>
    %cst_92 = arith.constant 0.000000e+00 : f32
    %79 = vector.broadcast %cst_92 : f32 to vector<8x324xf32>
    %80 = arith.cmpf ogt, %78, %79 : vector<8x324xf32>
    %c0_93 = arith.constant 0 : index
    %c0_94 = arith.constant 0 : index
    %81 = vector.load %arg9[%c0_93, %c0_94] : memref<8x1xf32, #tpu.memory_space<vmem>>, vector<8x1xf32>
    %82 = vector.broadcast %81 : vector<8x1xf32> to vector<8x324xf32>
    %83 = arith.mulf %82, %78 : vector<8x324xf32>
    %84 = arith.select %80, %78, %83 : vector<8x324xi1>, vector<8x324xf32>
    %cst_95 = arith.constant 0.000000e+00 : f32
    %85 = vector.broadcast %cst_95 : f32 to vector<8x60xf32>
    %86 = tpu.concatenate %84, %85 in 1 : vector<8x324xf32>, vector<8x60xf32> -> vector<8x384xf32>
    %c0_96 = arith.constant 0 : index
    %c0_97 = arith.constant 0 : index
    %c0_98 = arith.constant 0 : index
    %c0_99 = arith.constant 0 : index
    %87 = vector.load %arg10[%c0_96, %c0_97, %c0_98, %c0_99] : memref<1x1x8x384xf32, #tpu.memory_space<vmem>>, vector<1x1x8x384xf32>
    %88 = vector.shape_cast %87 : vector<1x1x8x384xf32> to vector<8x384xf32>
    %89 = vector.shape_cast %86 : vector<8x384xf32> to vector<1x1x8x384xf32>
    tpu.vector_store %arg10[%c0_96, %c0_97, %c0_98, %c0_99], %89 {strides = array<i32>} : memref<1x1x8x384xf32, #tpu.memory_space<vmem>>, vector<1x1x8x384xf32>,
    return
  }
  func.func @transform_0(%arg0: i32, %arg1: i32) -> (i32, i32, i32, i32) {
    %c0_i32 = arith.constant 0 : i32
    %c0_i32_0 = arith.constant 0 : i32
    %c0_i32_1 = arith.constant 0 : i32
    return %arg0, %arg1, %c0_i32, %c0_i32_0 : i32, i32, i32, i32
  }
  func.func @transform_1(%arg0: i32, %arg1: i32) -> (i32, i32, i32) {
    %c0_i32 = arith.constant 0 : i32
    %c0_i32_0 = arith.constant 0 : i32
    %c0_i32_1 = arith.constant 0 : i32
    return %arg1, %c0_i32, %c0_i32_0 : i32, i32, i32
  }
  func.func @transform_2(%arg0: i32, %arg1: i32) -> (i32, i32) {
    %c0_i32 = arith.constant 0 : i32
    %c0_i32_0 = arith.constant 0 : i32
    %c0_i32_1 = arith.constant 0 : i32
    return %c0_i32, %c0_i32_0 : i32, i32
  }
  func.func @transform_3(%arg0: i32, %arg1: i32) -> (i32, i32) {
    %c0_i32 = arith.constant 0 : i32
    %c0_i32_0 = arith.constant 0 : i32
    %c0_i32_1 = arith.constant 0 : i32
    return %c0_i32, %c0_i32_0 : i32, i32
  }
  func.func @transform_4(%arg0: i32, %arg1: i32) -> (i32, i32) {
    %c0_i32 = arith.constant 0 : i32
    %c0_i32_0 = arith.constant 0 : i32
    %c0_i32_1 = arith.constant 0 : i32
    return %c0_i32, %c0_i32_0 : i32, i32
  }
  func.func @transform_5(%arg0: i32, %arg1: i32) -> (i32, i32) {
    %c0_i32 = arith.constant 0 : i32
    %c0_i32_0 = arith.constant 0 : i32
    %c0_i32_1 = arith.constant 0 : i32
    return %c0_i32, %c0_i32_0 : i32, i32
  }
  func.func @transform_6(%arg0: i32, %arg1: i32) -> (i32, i32) {
    %c0_i32 = arith.constant 0 : i32
    %c0_i32_0 = arith.constant 0 : i32
    %c0_i32_1 = arith.constant 0 : i32
    return %c0_i32, %c0_i32_0 : i32, i32
  }
  func.func @transform_7(%arg0: i32, %arg1: i32) -> (i32, i32) {
    %c0_i32 = arith.constant 0 : i32
    %c0_i32_0 = arith.constant 0 : i32
    %c0_i32_1 = arith.constant 0 : i32
    return %c0_i32, %c0_i32_0 : i32, i32
  }
  func.func @transform_8(%arg0: i32, %arg1: i32) -> (i32, i32, i32, i32) {
    %c0_i32 = arith.constant 0 : i32
    %c0_i32_0 = arith.constant 0 : i32
    %c0_i32_1 = arith.constant 0 : i32
    return %arg0, %arg1, %c0_i32, %c0_i32_0 : i32, i32, i32, i32
  }
}

</mosaic_0001>

<llo_original>
// kernel: tpu_custom_call.1
$region0: #{tpu_custom_call.1}
  #allocation0 [shape = 'u32[]', space=smem, size = 0x4, offset = 0x4, fixed_abs, tag = 'smem constant byte address 0x4 - core index']
  #allocation1 [shape = 'u32[144,128]{1,0:T(1,128)}', space=vmem, size = 0x12000, scoped, tag = 'internal scratch']
  #allocation2 [shape = 'f32[4,616]{1,0:T(4,128)}', space=vmem, size = 0x2800, scoped, tag = 'scratch operand']
  #allocation3 [shape = 'f32[36,360]{1,0:T(8,128)}', space=vmem, size = 0xf000, scoped, tag = 'scratch operand']
  %s0 = inlined_call_operand.hbm [shape: f32[2,1,4,432], index: 0, kind: input, shape index: {}]
  %s1 = inlined_call_operand.vmem [shape: f32[1,1,360], index: 1, kind: input, shape index: {}]
  %s2 = inlined_call_operand.vmem [shape: f32[4,36], index: 2, kind: input, shape index: {}]
  %s3 = inlined_call_operand.vmem [shape: f32[4,1], index: 3, kind: input, shape index: {}]
  %s4 = inlined_call_operand.vmem [shape: f32[4,1], index: 4, kind: input, shape index: {}]
  %s5 = inlined_call_operand.vmem [shape: f32[8,36], index: 5, kind: input, shape index: {}]
  %s6 = inlined_call_operand.vmem [shape: f32[8,1], index: 6, kind: input, shape index: {}]
  %s7 = inlined_call_operand.vmem [shape: f32[8,1], index: 7, kind: input, shape index: {}]
  %s8 = inlined_call_operand.hbm [shape: f32[2,1,8,384], index: 8, kind: output, shape index: {}]
  %s9 = sld [smem:[#allocation0]]
  $region73: #{tpu_custom_call.1} parent=0
    _
  %s11 = ssub.s32 1, %s9
  %s12 = scalar_select 0, %s11, %s9
  $region1: #{tpu_custom_call.1} parent=0
    #allocation4 [shape = 'u8[16384]{0}', space=vmem, size = 0x4000, scoped, tag = 'input window, operand 0']
    #allocation5 [shape = 's32[2]{0}', space=sflag, size = 0x8, scoped, tag = 'scoped memory for tpu_custom_call.1']
    #allocation6 [shape = 's32[2]{0}', space=sflag, size = 0x8, scoped, tag = 'scoped memory for tpu_custom_call.1']
    #allocation7 [shape = 'u8[24576]{0}', space=vmem, size = 0x6000, scoped, tag = 'output window, operand 0']
    %13 = vsyncpa [#allocation5], 0
    %s14 = scalar_lea.sflag [#allocation5], 1
    %15 = vsyncpa %s14, 0
    %16 = vsyncpa [#allocation6], 0
    %s17 = scalar_lea.sflag [#allocation6], 1
    %18 = vsyncpa %s17, 0
    loop: start=0, step=1, limit=4
    $region2: #{tpu_custom_call.1} parent=1 // loop_pre_header
      _
    $region3: #{tpu_custom_call.1} parent=1 // loop_header
      %s20 = sphi 0, %s24
      %p21 = scmp.ge.s32.totalorder %s20, 4
      %s27 = sphi 0, %s39
      %s28 = sphi 0, %s35
      %s29 = sphi 0, %s27
      %s30 = sphi 0, %s28
      %s31 = sphi 0, %s29
      %s32 = sphi 0, %s30
      %s44 = sphi 0, %s46
      %s47 = sphi 0, %s44
      %s48 = sphi 0, %s47
      %s64 = sphi 0, %s48
      %s70 = sphi 0, %s72
      %s73 = sphi 0, %s70
      %s74 = sphi 0, %s73
      %s90 = sphi 0, %s74
      %s94 = sphi 0, %s94
      %s96 = sphi 0, %s94
      %s97 = sphi 0, %s96
      %s111 = sphi 0, %s97
      %s115 = sphi 0, %s115
      %s117 = sphi 0, %s115
      %s118 = sphi 0, %s117
      %s132 = sphi 0, %s118
      %s136 = sphi 0, %s136
      %s138 = sphi 0, %s136
      %s139 = sphi 0, %s138
      %s153 = sphi 0, %s139
      %s157 = sphi 0, %s157
      %s159 = sphi 0, %s157
      %s160 = sphi 0, %s159
      %s174 = sphi 0, %s160
      %s178 = sphi 0, %s178
      %s180 = sphi 0, %s178
      %s181 = sphi 0, %s180
      %s195 = sphi 0, %s181
      %s199 = sphi 0, %s199
      %s201 = sphi 0, %s199
      %s202 = sphi 0, %s201
      %s216 = sphi 0, %s202
      %s224 = sphi 0, %s226
      %s227 = sphi 0, %s224
      %s228 = sphi 0, %s227
      %s244 = sphi 0, %s228
    $region4: #{tpu_custom_call.1} parent=1 // loop_header_branch
      %23 = sbr.rel (%p21) target = $region8
    $region5: #{tpu_custom_call.1} parent=1 // loop_body
      %s25 = ssub.s32 %s20, 1
      %s26 = ssub.s32 %s20, 2
      %s33 = sadd.s32 1, %s28
      %p34 = scmp.ge.s32.totalorder %s33, 1
      %s35 = scalar_select %p34, 0, %s33
      %s36 = sadd.s32 1, %s27
      %s37 = scalar_select %p34, %s36, %s27
      %p38 = scmp.ge.s32.totalorder %s37, 2
      %s39 = scalar_select %p38, 0, %s37
      %s40 = ssub.s32 %s27, %s39
      %s41 = ssub.s32 %s28, %s35
      %s42 = sor.u32 %s40, %s41
      %p43 = scmp.eq.s32.totalorder %s42, 0
      %s45 = sadd.s32 %s44, 1
      %s46 = scalar_select %p43, %s44, %s45
      %p49 = pneg %p43
      %p50 = scmp.eq.s32.totalorder %s20, 1
      %p51 = por %p49, %p50
      %p52 = scmp.ne.s32.totalorder %s44, %s47
      %p53 = scmp.eq.s32.totalorder %s20, 0
      %p54 = por %p52, %p53
      %p55 = scmp.ne.s32.totalorder %s44, %s47
      %p56 = scmp.eq.s32.totalorder %s25, 1
      %p57 = por %p55, %p56
      %p58 = scmp.ne.s32.totalorder %s47, %s48
      %p59 = scmp.eq.s32.totalorder %s25, 0
      %p60 = por %p58, %p59
      %p61 = scmp.ne.s32.totalorder %s47, %s48
      %p62 = scmp.eq.s32.totalorder %s26, 1
      %p63 = por %p61, %p62
      %p65 = scmp.ne.s32.totalorder %s48, %s64
      %p66 = scmp.eq.s32.totalorder %s26, 0
      %p67 = por %p65, %p66
      %s68 = ssub.s32 %s28, %s35
      %p69 = scmp.eq.s32.totalorder %s68, 0
      %s71 = sadd.s32 %s70, 1
      %s72 = scalar_select %p69, %s70, %s71
      %p75 = pneg %p69
      %p76 = scmp.eq.s32.totalorder %s20, 1
      %p77 = por %p75, %p76
      %p78 = scmp.ne.s32.totalorder %s70, %s73
      %p79 = scmp.eq.s32.totalorder %s20, 0
      %p80 = por %p78, %p79
      %p81 = scmp.ne.s32.totalorder %s70, %s73
      %p82 = scmp.eq.s32.totalorder %s25, 1
      %p83 = por %p81, %p82
      %p84 = scmp.ne.s32.totalorder %s73, %s74
      %p85 = scmp.eq.s32.totalorder %s25, 0
      %p86 = por %p84, %p85
      %p87 = scmp.ne.s32.totalorder %s73, %s74
      %p88 = scmp.eq.s32.totalorder %s26, 1
      %p89 = por %p87, %p88
      %p91 = scmp.ne.s32.totalorder %s74, %s90
      %p92 = scmp.eq.s32.totalorder %s26, 0
      %p93 = por %p91, %p92
      %s95 = sadd.s32 %s94, 1
      %p98 = scmp.eq.s32.totalorder %s20, 1
      %p99 = scmp.ne.s32.totalorder %s94, %s96
      %p100 = scmp.eq.s32.totalorder %s20, 0
      %p101 = por %p99, %p100
      %p102 = scmp.ne.s32.totalorder %s94, %s96
      %p103 = scmp.eq.s32.totalorder %s25, 1
      %p104 = por %p102, %p103
      %p105 = scmp.ne.s32.totalorder %s96, %s97
      %p106 = scmp.eq.s32.totalorder %s25, 0
      %p107 = por %p105, %p106
      %p108 = scmp.ne.s32.totalorder %s96, %s97
      %p109 = scmp.eq.s32.totalorder %s26, 1
      %p110 = por %p108, %p109
      %p112 = scmp.ne.s32.totalorder %s97, %s111
      %p113 = scmp.eq.s32.totalorder %s26, 0
      %p114 = por %p112, %p113
      %s116 = sadd.s32 %s115, 1
      %p119 = scmp.eq.s32.totalorder %s20, 1
      %p120 = scmp.ne.s32.totalorder %s115, %s117
      %p121 = scmp.eq.s32.totalorder %s20, 0
      %p122 = por %p120, %p121
      %p123 = scmp.ne.s32.totalorder %s115, %s117
      %p124 = scmp.eq.s32.totalorder %s25, 1
      %p125 = por %p123, %p124
      %p126 = scmp.ne.s32.totalorder %s117, %s118
      %p127 = scmp.eq.s32.totalorder %s25, 0
      %p128 = por %p126, %p127
      %p129 = scmp.ne.s32.totalorder %s117, %s118
      %p130 = scmp.eq.s32.totalorder %s26, 1
      %p131 = por %p129, %p130
      %p133 = scmp.ne.s32.totalorder %s118, %s132
      %p134 = scmp.eq.s32.totalorder %s26, 0
      %p135 = por %p133, %p134
      %s137 = sadd.s32 %s136, 1
      %p140 = scmp.eq.s32.totalorder %s20, 1
      %p141 = scmp.ne.s32.totalorder %s136, %s138
      %p142 = scmp.eq.s32.totalorder %s20, 0
      %p143 = por %p141, %p142
      %p144 = scmp.ne.s32.totalorder %s136, %s138
      %p145 = scmp.eq.s32.totalorder %s25, 1
      %p146 = por %p144, %p145
      %p147 = scmp.ne.s32.totalorder %s138, %s139
      %p148 = scmp.eq.s32.totalorder %s25, 0
      %p149 = por %p147, %p148
      %p150 = scmp.ne.s32.totalorder %s138, %s139
      %p151 = scmp.eq.s32.totalorder %s26, 1
      %p152 = por %p150, %p151
      %p154 = scmp.ne.s32.totalorder %s139, %s153
      %p155 = scmp.eq.s32.totalorder %s26, 0
      %p156 = por %p154, %p155
      %s158 = sadd.s32 %s157, 1
      %p161 = scmp.eq.s32.totalorder %s20, 1
      %p162 = scmp.ne.s32.totalorder %s157, %s159
      %p163 = scmp.eq.s32.totalorder %s20, 0
      %p164 = por %p162, %p163
      %p165 = scmp.ne.s32.totalorder %s157, %s159
      %p166 = scmp.eq.s32.totalorder %s25, 1
      %p167 = por %p165, %p166
      %p168 = scmp.ne.s32.totalorder %s159, %s160
      %p169 = scmp.eq.s32.totalorder %s25, 0
      %p170 = por %p168, %p169
      %p171 = scmp.ne.s32.totalorder %s159, %s160
      %p172 = scmp.eq.s32.totalorder %s26, 1
      %p173 = por %p171, %p172
      %p175 = scmp.ne.s32.totalorder %s160, %s174
      %p176 = scmp.eq.s32.totalorder %s26, 0
      %p177 = por %p175, %p176
      %s179 = sadd.s32 %s178, 1
      %p182 = scmp.eq.s32.totalorder %s20, 1
      %p183 = scmp.ne.s32.totalorder %s178, %s180
      %p184 = scmp.eq.s32.totalorder %s20, 0
      %p185 = por %p183, %p184
      %p186 = scmp.ne.s32.totalorder %s178, %s180
      %p187 = scmp.eq.s32.totalorder %s25, 1
      %p188 = por %p186, %p187
      %p189 = scmp.ne.s32.totalorder %s180, %s181
      %p190 = scmp.eq.s32.totalorder %s25, 0
      %p191 = por %p189, %p190
      %p192 = scmp.ne.s32.totalorder %s180, %s181
      %p193 = scmp.eq.s32.totalorder %s26, 1
      %p194 = por %p192, %p193
      %p196 = scmp.ne.s32.totalorder %s181, %s195
      %p197 = scmp.eq.s32.totalorder %s26, 0
      %p198 = por %p196, %p197
      %s200 = sadd.s32 %s199, 1
      %p203 = scmp.eq.s32.totalorder %s20, 1
      %p204 = scmp.ne.s32.totalorder %s199, %s201
      %p205 = scmp.eq.s32.totalorder %s20, 0
      %p206 = por %p204, %p205
      %p207 = scmp.ne.s32.totalorder %s199, %s201
      %p208 = scmp.eq.s32.totalorder %s25, 1
      %p209 = por %p207, %p208
      %p210 = scmp.ne.s32.totalorder %s201, %s202
      %p211 = scmp.eq.s32.totalorder %s25, 0
      %p212 = por %p210, %p211
      %p213 = scmp.ne.s32.totalorder %s201, %s202
      %p214 = scmp.eq.s32.totalorder %s26, 1
      %p215 = por %p213, %p214
      %p217 = scmp.ne.s32.totalorder %s202, %s216
      %p218 = scmp.eq.s32.totalorder %s26, 0
      %p219 = por %p217, %p218
      %s220 = ssub.s32 %s27, %s39
      %s221 = ssub.s32 %s28, %s35
      %s222 = sor.u32 %s220, %s221
      %p223 = scmp.eq.s32.totalorder %s222, 0
      %s225 = sadd.s32 %s224, 1
      %s226 = scalar_select %p223, %s224, %s225
      %p229 = pneg %p223
      %p230 = scmp.eq.s32.totalorder %s20, 1
      %p231 = por %p229, %p230
      %p232 = scmp.ne.s32.totalorder %s224, %s227
      %p233 = scmp.eq.s32.totalorder %s20, 0
      %p234 = por %p232, %p233
      %p235 = scmp.ne.s32.totalorder %s224, %s227
      %p236 = scmp.eq.s32.totalorder %s25, 1
      %p237 = por %p235, %p236
      %p238 = scmp.ne.s32.totalorder %s227, %s228
      %p239 = scmp.eq.s32.totalorder %s25, 0
      %p240 = por %p238, %p239
      %p241 = scmp.ne.s32.totalorder %s227, %s228
      %p242 = scmp.eq.s32.totalorder %s26, 1
      %p243 = por %p241, %p242
      %p245 = scmp.ne.s32.totalorder %s228, %s244
      %p246 = scmp.eq.s32.totalorder %s26, 0
      %p247 = por %p245, %p246
      %p248 = scmp.le.s32.totalorder 1, %s20
      %p249 = scmp.lt.s32.totalorder %s20, 3
      %p250 = pnand %p248, %p249
      %p251 = pneg %p250
      // Predicated region
      $region9: #{tpu_custom_call.1} parent=5 // pred_check
        _
      $region10: #{tpu_custom_call.1} parent=5 // pred_check_branch
        %253 = sbr.rel (%p250) target = $region12
      $region11: #{tpu_custom_call.1} parent=5 // pred_region
        %s254 = ssub.s32 %s20, 1
        // Predicated region
        $region13: #{tpu_custom_call.1} parent=11 // pred_check
          %p255 = pneg %p86
        $region14: #{tpu_custom_call.1} parent=11 // pred_check_branch
          %257 = sbr.rel (%p255) target = $region16
        $region15: #{tpu_custom_call.1} parent=11 // pred_region
          %p258 = scmp.lt.s32.totalorder %s30, 0
          %s259 = scalar_select %p258, %s30, 0
          %s260 = smul.addr %s259, 3
          %s261 = scalar_lea.vmem %s1, %s260
        $region16: #{tpu_custom_call.1} parent=11 // pred_fallthru
          _
        // Predicated region
        $region17: #{tpu_custom_call.1} parent=11 // pred_check
          %p262 = pneg %p107
        $region18: #{tpu_custom_call.1} parent=11 // pred_check_branch
          %264 = sbr.rel (%p262) target = $region20
        $region19: #{tpu_custom_call.1} parent=11 // pred_region
          _
        $region20: #{tpu_custom_call.1} parent=11 // pred_fallthru
          _
        // Predicated region
        $region21: #{tpu_custom_call.1} parent=11 // pred_check
          %p265 = pneg %p128
        $region22: #{tpu_custom_call.1} parent=11 // pred_check_branch
          %267 = sbr.rel (%p265) target = $region24
        $region23: #{tpu_custom_call.1} parent=11 // pred_region
          _
        $region24: #{tpu_custom_call.1} parent=11 // pred_fallthru
          _
        // Predicated region
        $region25: #{tpu_custom_call.1} parent=11 // pred_check
          %p268 = pneg %p149
        $region26: #{tpu_custom_call.1} parent=11 // pred_check_branch
          %270 = sbr.rel (%p268) target = $region28
        $region27: #{tpu_custom_call.1} parent=11 // pred_region
          _
        $region28: #{tpu_custom_call.1} parent=11 // pred_fallthru
          _
        // Predicated region
        $region29: #{tpu_custom_call.1} parent=11 // pred_check
          %p271 = pneg %p170
        $region30: #{tpu_custom_call.1} parent=11 // pred_check_branch
          %273 = sbr.rel (%p271) target = $region32
        $region31: #{tpu_custom_call.1} parent=11 // pred_region
          _
        $region32: #{tpu_custom_call.1} parent=11 // pred_fallthru
          _
        // Predicated region
        $region33: #{tpu_custom_call.1} parent=11 // pred_check
          %p274 = pneg %p191
        $region34: #{tpu_custom_call.1} parent=11 // pred_check_branch
          %276 = sbr.rel (%p274) target = $region36
        $region35: #{tpu_custom_call.1} parent=11 // pred_region
          _
        $region36: #{tpu_custom_call.1} parent=11 // pred_fallthru
          _
        // Predicated region
        $region37: #{tpu_custom_call.1} parent=11 // pred_check
          %p277 = pneg %p212
        $region38: #{tpu_custom_call.1} parent=11 // pred_check_branch
          %279 = sbr.rel (%p277) target = $region40
        $region39: #{tpu_custom_call.1} parent=11 // pred_region
          _
        $region40: #{tpu_custom_call.1} parent=11 // pred_fallthru
          _
      $region12: #{tpu_custom_call.1} parent=5 // pred_fallthru
        _
      %p280 = scmp.lt.s32.totalorder %s20, 2
      // Predicated region
      $region41: #{tpu_custom_call.1} parent=5 // pred_check
        %p281 = pneg %p280
      $region42: #{tpu_custom_call.1} parent=5 // pred_check_branch
        %283 = sbr.rel (%p281) target = $region44
      $region43: #{tpu_custom_call.1} parent=5 // pred_region
        // Predicated region
        $region45: #{tpu_custom_call.1} parent=43 // pred_check
          %p284 = pneg %p54
        $region46: #{tpu_custom_call.1} parent=43 // pred_check_branch
          %286 = sbr.rel (%p284) target = $region48
        $region47: #{tpu_custom_call.1} parent=43 // pred_region
          %s287 = sand.u32 %s44, 1
          %s288 = scalar_lea.sflag [#allocation5], %s287
          %s289 = sand.u32 %s44, 1
          %s290 = smul.addr %s289, 16
          %s291 = scalar_lea.vmem [#allocation4], %s290
          %s293 = ssub.s32 256, 256
          %294 = vsyncadd %s288, %s293
          %s295 = smul.addr %s28, 4
          %s296 = smul.addr %s27, 4
          %s297 = sadd.s32 %s295, %s296
          %s298 = smul.addr %s297, 64
          %s299 = scalar_lea.hbm %s0, %s298
          %s301 = sshll.u32 %s291, 4
          %s302 = int_to_ptr.vmem [resolvable:$true] %s301
          %304 = dma.hbm_to_vmem [thread:$0]  %s299, 256, %s302, %s288
        $region48: #{tpu_custom_call.1} parent=43 // pred_fallthru
          _
      $region44: #{tpu_custom_call.1} parent=5 // pred_fallthru
        _
      %p305 = scmp.le.s32.totalorder 1, %s20
      %p306 = scmp.lt.s32.totalorder %s20, 3
      %p307 = pnand %p305, %p306
      %p308 = pneg %p307
      // Predicated region
      $region49: #{tpu_custom_call.1} parent=5 // pred_check
        _
      $region50: #{tpu_custom_call.1} parent=5 // pred_check_branch
        %310 = sbr.rel (%p307) target = $region52
      $region51: #{tpu_custom_call.1} parent=5 // pred_region
        %s311 = ssub.s32 %s20, 1
        %s312 = sand.u32 %s47, 1
        %s313 = scalar_lea.sflag [#allocation5], %s312
        %s314 = sand.u32 %s47, 1
        %s315 = smul.addr %s314, 16
        %s316 = scalar_lea.vmem [#allocation4], %s315
        // Predicated region
        $region53: #{tpu_custom_call.1} parent=51 // pred_check
          %p317 = pneg %p60
        $region54: #{tpu_custom_call.1} parent=51 // pred_check_branch
          %319 = sbr.rel (%p317) target = $region56
        $region55: #{tpu_custom_call.1} parent=51 // pred_region
          %320 = dma.done %s313, 256
        $region56: #{tpu_custom_call.1} parent=51 // pred_fallthru
          _
        %s321 = sand.u32 %s47, 1
        %s322 = scalar_lea.sflag [#allocation5], %s321
        %s323 = sand.u32 %s47, 1
        %s324 = smul.addr %s323, 16
        %s325 = scalar_lea.vmem [#allocation4], %s324
        %p326 = pneg %p60
        %p327 = pneg %p57
        %p328 = scmp.lt.s32.totalorder %s30, 0
        %s329 = scalar_select %p328, %s30, 0
        %s330 = smul.addr %s329, 3
        %s331 = scalar_lea.vmem %s1, %s330
        %p332 = pneg %p86
        %p333 = pneg %p83
        %p334 = pneg %p107
        %p335 = pneg %p104
        %p336 = pneg %p128
        %p337 = pneg %p125
        %p338 = pneg %p149
        %p339 = pneg %p146
        %p340 = pneg %p170
        %p341 = pneg %p167
        %p342 = pneg %p191
        %p343 = pneg %p188
        %p344 = pneg %p212
        %p345 = pneg %p209
        %p346 = pneg %p240
        %p347 = pneg %p237
        %s348 = sand.u32 %s227, 1
        %s349 = scalar_lea.sflag [#allocation6], %s348
        %s350 = sand.u32 %s227, 1
        %s351 = smul.addr %s350, 24
        %s352 = scalar_lea.vmem [#allocation7], %s351
        %p353 = scmp.lt.s32.totalorder %s30, 0
        %s354 = scalar_select %p353, %s30, 0
        %s355 = smul.addr %s354, 3
        %s356 = scalar_lea.vmem %s1, %s355
        %p357 = scmp.eq.s32.totalorder %s29, 0
        %p358 = scmp.eq.s32.totalorder %s30, 0
        %p359 = pnand %p357, %p358
        %p360 = pneg %p359
        // Predicated region
        $region57: #{tpu_custom_call.1} parent=51 // pred_check
          _
        $region58: #{tpu_custom_call.1} parent=51 // pred_check_branch
          %362 = sbr.rel (%p359) target = $region60
        $region59: #{tpu_custom_call.1} parent=51 // pred_region
          %363 = vst [vmem:[#allocation2] sm:$0xf] 0.0
          %vm364 = vcmask 1044288
          %vm365 = vcmask 850948
          %vm366 = vmor %vm365, %vm364
          %367 = vst.msk [vmem:[#allocation2 + $0xc] sm:$0xff] %vm366, 0.0
        $region60: #{tpu_custom_call.1} parent=51 // pred_fallthru
          _
        %v368 = vld [vmem:[%s316] sm:$0xff]
        %v369 = vld [vmem:[%s316 + $0x8] sm:$0xf]
        %v372 = vcombine.high %v368, %v368
        %373 = vrot.lane.b32.xlu0 %v368, 111
        %v374 = vpop.permute.xlu0 %373
        %375 = vrot.lane.b32.xlu0 %v372, 111
        %v376 = vpop.permute.xlu0 %375
        %377 = vrot.lane.b32.xlu0 %v369, 111
        %v378 = vpop.permute.xlu0 %377
        %vm379 = vcmask 908288
        %v380 = vsel %vm379, %v374, %v376
        %v381 = vsel %vm379, %v376, %v378
        %385 = vst [vmem:[#allocation3] sm:$0xf] %v380
        %386 = vst [vmem:[#allocation3 + $0x8] sm:$0xf] %v381
        %vm387 = vcmask 846848
        %388 = vst.msk [vmem:[#allocation3 + $0x10] sm:$0xf] %vm387, %v378
        %v389 = vld [vmem:[%s316] sm:$0xff]
        %v390 = vld [vmem:[%s316 + $0x8] sm:$0xf]
        %v393 = vcombine.low %v389, %v389
        %v394 = vcombine.low %v390, %v390
        %395 = vrot.lane.b32.xlu0 %v393, 110
        %v396 = vpop.permute.xlu0 %395
        %397 = vrot.lane.b32.xlu0 %v389, 110
        %v398 = vpop.permute.xlu0 %397
        %399 = vrot.lane.b32.xlu0 %v394, 110
        %v400 = vpop.permute.xlu0 %399
        %vm401 = vcmask 900096
        %v402 = vsel %vm401, %v396, %v398
        %v403 = vsel %vm401, %v398, %v400
        %407 = vst [vmem:[#allocation3] sm:$0xf0] %v402
        %408 = vst [vmem:[#allocation3 + $0x8] sm:$0xf0] %v403
        %vm409 = vcmask 850948
        %410 = vst.msk [vmem:[#allocation3 + $0x10] sm:$0xf0] %vm409, %v400
        %v411 = vld [vmem:[%s316] sm:$0xff]
        %v412 = vld [vmem:[%s316 + $0x8] sm:$0xf]
        %v415 = vcombine.high %v411, %v411
        %416 = vrot.lane.b32.xlu0 %v411, 109
        %v417 = vpop.permute.xlu0 %416
        %418 = vrot.lane.b32.xlu0 %v415, 109
        %v419 = vpop.permute.xlu0 %418
        %420 = vrot.lane.b32.xlu0 %v412, 109
        %v421 = vpop.permute.xlu0 %420
        %vm422 = vcmask 891904
        %v423 = vsel %vm422, %v417, %v419
        %v424 = vsel %vm422, %v419, %v421
        %428 = vst [vmem:[#allocation3 + $0x18] sm:$0xf] %v423
        %429 = vst [vmem:[#allocation3 + $0x20] sm:$0xf] %v424
        %430 = vst.msk [vmem:[#allocation3 + $0x28] sm:$0xf] %vm387, %v421
        %v431 = vld [vmem:[%s316] sm:$0xff]
        %v432 = vld [vmem:[%s316 + $0x8] sm:$0xff]
        %v435 = vcombine.low %v431, %v431
        %v436 = vcombine.low %v432, %v432
        %437 = vrot.lane.b32.xlu0 %v435, 93
        %v438 = vpop.permute.xlu0 %437
        %439 = vrot.lane.b32.xlu0 %v431, 93
        %v440 = vpop.permute.xlu0 %439
        %441 = vrot.lane.b32.xlu0 %v436, 93
        %v442 = vpop.permute.xlu0 %441
        %443 = vrot.lane.b32.xlu0 %v432, 93
        %v444 = vpop.permute.xlu0 %443
        %vm445 = vcmask 760832
        %v446 = vsel %vm445, %v438, %v440
        %v447 = vsel %vm445, %v440, %v442
        %v448 = vsel %vm445, %v442, %v444
        %452 = vst [vmem:[#allocation3 + $0x18] sm:$0xf0] %v446
        %453 = vst [vmem:[#allocation3 + $0x20] sm:$0xf0] %v447
        %454 = vst.msk [vmem:[#allocation3 + $0x28] sm:$0xf0] %vm409, %v448
        %v455 = vld [vmem:[%s316] sm:$0xff]
        %v456 = vld [vmem:[%s316 + $0x8] sm:$0xff]
        %v459 = vcombine.high %v455, %v455
        %v460 = vcombine.high %v456, %v456
        %461 = vrot.lane.b32.xlu0 %v455, 92
        %v462 = vpop.permute.xlu0 %461
        %463 = vrot.lane.b32.xlu0 %v459, 92
        %v464 = vpop.permute.xlu0 %463
        %465 = vrot.lane.b32.xlu0 %v456, 92
        %v466 = vpop.permute.xlu0 %465
        %467 = vrot.lane.b32.xlu0 %v460, 92
        %v468 = vpop.permute.xlu0 %467
        %vm469 = vcmask 752640
        %v470 = vsel %vm469, %v462, %v464
        %v471 = vsel %vm469, %v464, %v466
        %v472 = vsel %vm469, %v466, %v468
        %476 = vst [vmem:[#allocation3 + $0x30] sm:$0xf] %v470
        %477 = vst [vmem:[#allocation3 + $0x38] sm:$0xf] %v471
        %478 = vst.msk [vmem:[#allocation3 + $0x40] sm:$0xf] %vm387, %v472
        %v479 = vld [vmem:[%s316] sm:$0xff]
        %v480 = vld [vmem:[%s316 + $0x8] sm:$0xff]
        %v483 = vcombine.low %v479, %v479
        %v484 = vcombine.low %v480, %v480
        %485 = vrot.lane.b32.xlu0 %v483, 91
        %v486 = vpop.permute.xlu0 %485
        %487 = vrot.lane.b32.xlu0 %v479, 91
        %v488 = vpop.permute.xlu0 %487
        %489 = vrot.lane.b32.xlu0 %v484, 91
        %v490 = vpop.permute.xlu0 %489
        %491 = vrot.lane.b32.xlu0 %v480, 91
        %v492 = vpop.permute.xlu0 %491
        %vm493 = vcmask 744448
        %v494 = vsel %vm493, %v486, %v488
        %v495 = vsel %vm493, %v488, %v490
        %v496 = vsel %vm493, %v490, %v492
        %500 = vst [vmem:[#allocation3 + $0x30] sm:$0xf0] %v494
        %501 = vst [vmem:[#allocation3 + $0x38] sm:$0xf0] %v495
        %502 = vst.msk [vmem:[#allocation3 + $0x40] sm:$0xf0] %vm409, %v496
        %v503 = vld [vmem:[%s316] sm:$0xff]
        %v504 = vld [vmem:[%s316 + $0x8] sm:$0xff]
        %v507 = vcombine.high %v503, %v503
        %v508 = vcombine.high %v504, %v504
        %509 = vrot.lane.b32.xlu0 %v503, 75
        %v510 = vpop.permute.xlu0 %509
        %511 = vrot.lane.b32.xlu0 %v507, 75
        %v512 = vpop.permute.xlu0 %511
        %513 = vrot.lane.b32.xlu0 %v504, 75
        %v514 = vpop.permute.xlu0 %513
        %515 = vrot.lane.b32.xlu0 %v508, 75
        %v516 = vpop.permute.xlu0 %515
        %vm517 = vcmask 613376
        %v518 = vsel %vm517, %v510, %v512
        %v519 = vsel %vm517, %v512, %v514
        %v520 = vsel %vm517, %v514, %v516
        %524 = vst [vmem:[#allocation3 + $0x48] sm:$0xf] %v518
        %525 = vst [vmem:[#allocation3 + $0x50] sm:$0xf] %v519
        %526 = vst.msk [vmem:[#allocation3 + $0x58] sm:$0xf] %vm387, %v520
        %v527 = vld [vmem:[%s316] sm:$0xff]
        %v528 = vld [vmem:[%s316 + $0x8] sm:$0xff]
        %v531 = vcombine.low %v527, %v527
        %v532 = vcombine.low %v528, %v528
        %533 = vrot.lane.b32.xlu0 %v531, 74
        %v534 = vpop.permute.xlu0 %533
        %535 = vrot.lane.b32.xlu0 %v527, 74
        %v536 = vpop.permute.xlu0 %535
        %537 = vrot.lane.b32.xlu0 %v532, 74
        %v538 = vpop.permute.xlu0 %537
        %539 = vrot.lane.b32.xlu0 %v528, 74
        %v540 = vpop.permute.xlu0 %539
        %vm541 = vcmask 605184
        %v542 = vsel %vm541, %v534, %v536
        %v543 = vsel %vm541, %v536, %v538
        %v544 = vsel %vm541, %v538, %v540
        %548 = vst [vmem:[#allocation3 + $0x48] sm:$0xf0] %v542
        %549 = vst [vmem:[#allocation3 + $0x50] sm:$0xf0] %v543
        %550 = vst.msk [vmem:[#allocation3 + $0x58] sm:$0xf0] %vm409, %v544
        %v551 = vld [vmem:[%s316] sm:$0xff]
        %v552 = vld [vmem:[%s316 + $0x8] sm:$0xff]
        %v555 = vcombine.high %v551, %v551
        %v556 = vcombine.high %v552, %v552
        %557 = vrot.lane.b32.xlu0 %v551, 73
        %v558 = vpop.permute.xlu0 %557
        %559 = vrot.lane.b32.xlu0 %v555, 73
        %v560 = vpop.permute.xlu0 %559
        %561 = vrot.lane.b32.xlu0 %v552, 73
        %v562 = vpop.permute.xlu0 %561
        %563 = vrot.lane.b32.xlu0 %v556, 73
        %v564 = vpop.permute.xlu0 %563
        %vm565 = vcmask 596992
        %v566 = vsel %vm565, %v558, %v560
        %v567 = vsel %vm565, %v560, %v562
        %v568 = vsel %vm565, %v562, %v564
        %572 = vst [vmem:[#allocation3 + $0x60] sm:$0xf] %v566
        %573 = vst [vmem:[#allocation3 + $0x68] sm:$0xf] %v567
        %574 = vst.msk [vmem:[#allocation3 + $0x70] sm:$0xf] %vm387, %v568
        %v575 = vld [vmem:[%s2] sm:$0xf]
        %v576 = vld [vmem:[#allocation3] sm:$0xff]
        %v577 = vld [vmem:[#allocation3 + $0x8] sm:$0xff]
        %v578 = vld [vmem:[#allocation3 + $0x10] sm:$0xff]
        %v579 = vld [vmem:[#allocation3 + $0x18] sm:$0xff]
        %v580 = vld [vmem:[#allocation3 + $0x20] sm:$0xff]
        %v581 = vld [vmem:[#allocation3 + $0x28] sm:$0xff]
        %v582 = vld [vmem:[#allocation3 + $0x30] sm:$0xff]
        %v583 = vld [vmem:[#allocation3 + $0x38] sm:$0xff]
        %v584 = vld [vmem:[#allocation3 + $0x40] sm:$0xff]
        %v585 = vld [vmem:[#allocation3 + $0x48] sm:$0xff]
        %v586 = vld [vmem:[#allocation3 + $0x50] sm:$0xff]
        %v587 = vld [vmem:[#allocation3 + $0x58] sm:$0xff]
        %v588 = vld [vmem:[#allocation3 + $0x60] sm:$0xf]
        %v589 = vld [vmem:[#allocation3 + $0x68] sm:$0xf]
        %v590 = vld [vmem:[#allocation3 + $0x70] sm:$0xf]
        %v591 = vld [vmem:[%s3] sm:$0xf]
        %593 = vset.pattern.permute.xlu0 0
        %594 = vperm.xlu0 %593, %v591
        %v595 = vpop.permute.xlu0 %594
        %vm597 = vcmask 293888
        %v599 = vsel %vm597, %v575, 0
        %vm601 = vcmask 1043456
        %v603 = vsel %vm601, %v588, 0
        %v606 = vsel %vm601, %v589, 0
        %v609 = vsel %vm601, %v590, 0
        %611 = vmatprep.subr.mxu0 0.0
        %612 = vmatpush1.msra.mxu0 0.0
        %613 = vmatprep.subr.mxu0 0.0
        %614 = vmatpush1.msra.mxu0 0.0
        %615 = vmatprep.subr.mxu0 0.0
        %616 = vmatpush1.msra.mxu0 0.0
        %617 = vmatprep.subr.mxu0 0.0
        %618 = vmatpush1.msra.mxu0 0.0
        %619 = vmatprep.subr.mxu0 0.0
        %620 = vmatpush1.msra.mxu0 0.0
        %621 = vmatprep.subr.mxu0 0.0
        %622 = vmatpush1.msra.mxu0 0.0
        %623 = vmatprep.subr.mxu0 0.0
        %624 = vmatpush1.msra.mxu0 0.0
        %625 = vmatprep.subr.mxu0 0.0
        %626 = vmatpush1.msra.mxu0 0.0
        %627 = vmatprep.subr.mxu0 0.0
        %628 = vmatpush1.msra.mxu0 0.0
        %629 = vmatprep.subr.mxu0 0.0
        %630 = vmatpush1.msra.mxu0 0.0
        %631 = vmatprep.subr.mxu0 0.0
        %632 = vmatpush1.msra.mxu0 0.0
        %633 = vmatprep.subr.mxu0 %v606
        %634 = vmatpush1.msra.mxu0 %v603
        %635 = vmatprep.subr.mxu0 %v586
        %636 = vmatpush1.msra.mxu0 %v585
        %637 = vmatprep.subr.mxu0 %v583
        %638 = vmatpush1.msra.mxu0 %v582
        %639 = vmatprep.subr.mxu0 %v580
        %640 = vmatpush1.msra.mxu0 %v579
        %641 = vmatprep.subr.mxu0 %v577
        %642 = vmatpush1.msra.mxu0 %v576
        %643 = vmatprep.subr.mxu0 0.0
        %644 = vmatpush2.msra.mxu0 0.0
        %645 = vmatprep.subr.mxu0 0.0
        %646 = vmatpush2.msra.mxu0 0.0
        %647 = vmatprep.subr.mxu0 0.0
        %648 = vmatpush2.msra.mxu0 0.0
        %649 = vmatprep.subr.mxu0 0.0
        %650 = vmatpush2.msra.mxu0 0.0
        %651 = vmatprep.subr.mxu0 0.0
        %652 = vmatpush2.msra.mxu0 0.0
        %653 = vmatprep.subr.mxu0 0.0
        %654 = vmatpush2.msra.mxu0 0.0
        %655 = vmatprep.subr.mxu0 0.0
        %656 = vmatpush2.msra.mxu0 0.0
        %657 = vmatprep.subr.mxu0 0.0
        %658 = vmatpush2.msra.mxu0 0.0
        %659 = vmatprep.subr.mxu0 0.0
        %660 = vmatpush2.msra.mxu0 0.0
        %661 = vmatprep.subr.mxu0 0.0
        %662 = vmatpush2.msra.mxu0 0.0
        %663 = vmatprep.subr.mxu0 0.0
        %664 = vmatpush2.msra.mxu0 0.0
        %665 = vmatprep.subr.mxu0 0.0
        %666 = vmatpush2.msra.mxu0 0.0
        %667 = vmatprep.subr.mxu0 0.0
        %668 = vmatpush2.msra.mxu0 0.0
        %669 = vmatprep.subr.mxu0 0.0
        %670 = vmatpush2.msra.mxu0 0.0
        %671 = vmatprep.subr.mxu0 0.0
        %672 = vmatpush2.msra.mxu0 0.0
        %673 = vmatprep.subr.mxu0 0.0
        %674 = vmatpush2.msra.mxu0 0.0
        %675 = vmatprep.mubr.f32.mxu0 0.0
        %676 = vmatmul.mubr.f32.gmra.mxu0 %v599
        %v677 = vpop.f32.mrf.mxu0
        %v678 = vadd.f32 %v595, %v677
        %v679 = vpop.f32.mrf.mxu0
        %v680 = vadd.f32 %v595, %v679
        %681 = vdwg.mxu0
        %682 = vmatprep.subr.mxu0 0.0
        %683 = vmatpush1.msra.mxu0 0.0
        %684 = vmatprep.subr.mxu0 0.0
        %685 = vmatpush1.msra.mxu0 0.0
        %686 = vmatprep.subr.mxu0 0.0
        %687 = vmatpush1.msra.mxu0 0.0
        %688 = vmatprep.subr.mxu0 0.0
        %689 = vmatpush1.msra.mxu0 0.0
        %690 = vmatprep.subr.mxu0 0.0
        %691 = vmatpush1.msra.mxu0 0.0
        %692 = vmatprep.subr.mxu0 0.0
        %693 = vmatpush1.msra.mxu0 0.0
        %694 = vmatprep.subr.mxu0 0.0
        %695 = vmatpush1.msra.mxu0 0.0
        %696 = vmatprep.subr.mxu0 0.0
        %697 = vmatpush1.msra.mxu0 0.0
        %698 = vmatprep.subr.mxu0 0.0
        %699 = vmatpush1.msra.mxu0 0.0
        %700 = vmatprep.subr.mxu0 0.0
        %701 = vmatpush1.msra.mxu0 0.0
        %702 = vmatprep.subr.mxu0 0.0
        %703 = vmatpush1.msra.mxu0 0.0
        %704 = vmatprep.subr.mxu0 0.0
        %705 = vmatpush1.msra.mxu0 %v609
        %706 = vmatprep.subr.mxu0 0.0
        %707 = vmatpush1.msra.mxu0 %v587
        %708 = vmatprep.subr.mxu0 0.0
        %709 = vmatpush1.msra.mxu0 %v584
        %710 = vmatprep.subr.mxu0 0.0
        %711 = vmatpush1.msra.mxu0 %v581
        %712 = vmatprep.subr.mxu0 0.0
        %713 = vmatpush1.msra.mxu0 %v578
        %714 = vmatprep.subr.mxu0 0.0
        %715 = vmatpush2.msra.mxu0 0.0
        %716 = vmatprep.subr.mxu0 0.0
        %717 = vmatpush2.msra.mxu0 0.0
        %718 = vmatprep.subr.mxu0 0.0
        %719 = vmatpush2.msra.mxu0 0.0
        %720 = vmatprep.subr.mxu0 0.0
        %721 = vmatpush2.msra.mxu0 0.0
        %722 = vmatprep.subr.mxu0 0.0
        %723 = vmatpush2.msra.mxu0 0.0
        %724 = vmatprep.subr.mxu0 0.0
        %725 = vmatpush2.msra.mxu0 0.0
        %726 = vmatprep.subr.mxu0 0.0
        %727 = vmatpush2.msra.mxu0 0.0
        %728 = vmatprep.subr.mxu0 0.0
        %729 = vmatpush2.msra.mxu0 0.0
        %730 = vmatprep.subr.mxu0 0.0
        %731 = vmatpush2.msra.mxu0 0.0
        %732 = vmatprep.subr.mxu0 0.0
        %733 = vmatpush2.msra.mxu0 0.0
        %734 = vmatprep.subr.mxu0 0.0
        %735 = vmatpush2.msra.mxu0 0.0
        %736 = vmatprep.subr.mxu0 0.0
        %737 = vmatpush2.msra.mxu0 0.0
        %738 = vmatprep.subr.mxu0 0.0
        %739 = vmatpush2.msra.mxu0 0.0
        %740 = vmatprep.subr.mxu0 0.0
        %741 = vmatpush2.msra.mxu0 0.0
        %742 = vmatprep.subr.mxu0 0.0
        %743 = vmatpush2.msra.mxu0 0.0
        %744 = vmatprep.subr.mxu0 0.0
        %745 = vmatpush2.msra.mxu0 0.0
        %746 = vmatprep.mubr.f32.mxu0 0.0
        %747 = vmatmul.mubr.f32.gmra.mxu0 %v599
        %v748 = vpop.f32.mrf.mxu0
        %v749 = vadd.f32 %v595, %v748
        %v750 = vpop.f32.mrf.mxu0
        %751 = vdwg.mxu0
        %v752 = vld [vmem:[%s316] sm:$0xff]
        %v753 = vld [vmem:[%s316 + $0x8] sm:$0xff]
        %vm754 = vcmp.gt.f32.partialorder %v678, 0.0
        %vm755 = vcmp.gt.f32.partialorder %v680, 0.0
        %vm756 = vcmp.gt.f32.partialorder %v749, 0.0
        %v757 = vld [vmem:[%s4] sm:$0xf]
        %759 = vset.pattern.permute.xlu0 0
        %760 = vperm.xlu0 %759, %v757
        %v761 = vpop.permute.xlu0 %760
        %v763 = vmul.f32 %v761, %v678
        %v764 = vmul.f32 %v761, %v680
        %v765 = vmul.f32 %v761, %v749
        %v766 = vsel %vm754, %v678, %v763
        %v767 = vsel %vm755, %v680, %v764
        %v768 = vsel %vm756, %v749, %v765
        %v771 = vcombine.high %v752, %v752
        %v772 = vcombine.high %v753, %v753
        %773 = vrot.lane.b32.xlu0 %v752, 92
        %v774 = vpop.permute.xlu0 %773
        %775 = vrot.lane.b32.xlu0 %v771, 92
        %v776 = vpop.permute.xlu0 %775
        %777 = vrot.lane.b32.xlu0 %v753, 92
        %v778 = vpop.permute.xlu0 %777
        %779 = vrot.lane.b32.xlu0 %v772, 92
        %v780 = vpop.permute.xlu0 %779
        %v781 = vsel %vm469, %v774, %v776
        %v782 = vsel %vm469, %v776, %v778
        %v783 = vsel %vm469, %v778, %v780
        %v787 = vadd.f32 %v766, %v781
        %v788 = vadd.f32 %v767, %v782
        %v789 = vadd.f32 %v768, %v783
        %v790 = vld [vmem:[%s356] sm:$0x7]
        %v792 = vlaneseq
        %v793 = vshrl.u32 %v792, 7
        %v794 = vsub.s32 0, %v793
        %v795 = vrot.slane %v790, %v794
        %v796 = vlaneseq
        %v797 = vshrl.u32 %v796, 7
        %v798 = vsub.s32 1, %v797
        %v799 = vrot.slane %v790, %v798
        %v800 = vlaneseq
        %v801 = vshrl.u32 %v800, 7
        %v802 = vsub.s32 2, %v801
        %v803 = vrot.slane %v790, %v802
        %v807 = vmul.f32 %v787, %v795
        %v808 = vmul.f32 %v788, %v799
        %v809 = vmul.f32 %v789, %v803
        %v812 = vcombine.low %v807, %v808
        %814 = vst [vmem:[#allocation2 + $0x4] sm:$0xff] %v812
        %815 = vst.msk [vmem:[#allocation2 + $0xc] sm:$0xf] %vm387, %v809
        %v816 = vld [vmem:[#allocation2] sm:$0xff]
        %v817 = vld [vmem:[#allocation2 + $0x8] sm:$0xff]
        %v820 = vcombine.high %v816, %v816
        %v821 = vcombine.high %v817, %v817
        %822 = vrot.lane.b32.xlu0 %v816, 1
        %v823 = vpop.permute.xlu0 %822
        %824 = vrot.lane.b32.xlu0 %v820, 1
        %v825 = vpop.permute.xlu0 %824
        %826 = vrot.lane.b32.xlu0 %v817, 1
        %v827 = vpop.permute.xlu0 %826
        %828 = vrot.lane.b32.xlu0 %v821, 1
        %v829 = vpop.permute.xlu0 %828
        %vm830 = vcmask 7168
        %v831 = vsel %vm830, %v823, %v825
        %v832 = vsel %vm830, %v825, %v827
        %v833 = vsel %vm830, %v827, %v829
        %837 = vst [vmem:[#allocation3] sm:$0xf] %v831
        %838 = vst [vmem:[#allocation3 + $0x8] sm:$0xf] %v832
        %vm839 = vcmask 551936
        %840 = vst.msk [vmem:[#allocation3 + $0x10] sm:$0xf] %vm839, %v833
        %v841 = vld [vmem:[#allocation2 + $0x4] sm:$0xff]
        %v842 = vld [vmem:[#allocation2 + $0xc] sm:$0xf]
        %v845 = vcombine.low %v841, %v841
        %v846 = vcombine.low %v842, %v842
        %849 = vst [vmem:[#allocation3] sm:$0xf0] %v845
        %850 = vst [vmem:[#allocation3 + $0x8] sm:$0xf0] %v841
        %vm851 = vcmask 556036
        %852 = vst.msk [vmem:[#allocation3 + $0x10] sm:$0xf0] %vm851, %v846
        %v853 = vld [vmem:[#allocation2 + $0x4] sm:$0xff]
        %v854 = vld [vmem:[#allocation2 + $0xc] sm:$0xf]
        %v857 = vcombine.high %v853, %v853
        %858 = vrot.lane.b32.xlu0 %v853, 127
        %v859 = vpop.permute.xlu0 %858
        %860 = vrot.lane.b32.xlu0 %v857, 127
        %v861 = vpop.permute.xlu0 %860
        %862 = vrot.lane.b32.xlu0 %v854, 127
        %v863 = vpop.permute.xlu0 %862
        %vm864 = vcmask 1039360
        %v865 = vsel %vm864, %v859, %v861
        %v866 = vsel %vm864, %v861, %v863
        %870 = vst [vmem:[#allocation3 + $0x18] sm:$0xf] %v865
        %871 = vst [vmem:[#allocation3 + $0x20] sm:$0xf] %v866
        %872 = vst.msk [vmem:[#allocation3 + $0x28] sm:$0xf] %vm839, %v863
        %v873 = vld [vmem:[#allocation2 + $0x4] sm:$0xff]
        %v874 = vld [vmem:[#allocation2 + $0xc] sm:$0xf]
        %v877 = vcombine.low %v873, %v873
        %v878 = vcombine.low %v874, %v874
        %879 = vrot.lane.b32.xlu0 %v877, 111
        %v880 = vpop.permute.xlu0 %879
        %881 = vrot.lane.b32.xlu0 %v873, 111
        %v882 = vpop.permute.xlu0 %881
        %883 = vrot.lane.b32.xlu0 %v878, 111
        %v884 = vpop.permute.xlu0 %883
        %v885 = vsel %vm379, %v880, %v882
        %v886 = vsel %vm379, %v882, %v884
        %890 = vst [vmem:[#allocation3 + $0x18] sm:$0xf0] %v885
        %891 = vst [vmem:[#allocation3 + $0x20] sm:$0xf0] %v886
        %892 = vst.msk [vmem:[#allocation3 + $0x28] sm:$0xf0] %vm851, %v884
        %v893 = vld [vmem:[#allocation2 + $0x4] sm:$0xff]
        %v894 = vld [vmem:[#allocation2 + $0xc] sm:$0xf]
        %v897 = vcombine.high %v893, %v893
        %898 = vrot.lane.b32.xlu0 %v893, 110
        %v899 = vpop.permute.xlu0 %898
        %900 = vrot.lane.b32.xlu0 %v897, 110
        %v901 = vpop.permute.xlu0 %900
        %902 = vrot.lane.b32.xlu0 %v894, 110
        %v903 = vpop.permute.xlu0 %902
        %v904 = vsel %vm401, %v899, %v901
        %v905 = vsel %vm401, %v901, %v903
        %909 = vst [vmem:[#allocation3 + $0x30] sm:$0xf] %v904
        %910 = vst [vmem:[#allocation3 + $0x38] sm:$0xf] %v905
        %911 = vst.msk [vmem:[#allocation3 + $0x40] sm:$0xf] %vm839, %v903
        %v912 = vld [vmem:[#allocation2 + $0x4] sm:$0xff]
        %v913 = vld [vmem:[#allocation2 + $0xc] sm:$0xf]
        %v916 = vcombine.low %v912, %v912
        %v917 = vcombine.low %v913, %v913
        %918 = vrot.lane.b32.xlu0 %v916, 109
        %v919 = vpop.permute.xlu0 %918
        %920 = vrot.lane.b32.xlu0 %v912, 109
        %v921 = vpop.permute.xlu0 %920
        %922 = vrot.lane.b32.xlu0 %v917, 109
        %v923 = vpop.permute.xlu0 %922
        %v924 = vsel %vm422, %v919, %v921
        %v925 = vsel %vm422, %v921, %v923
        %929 = vst [vmem:[#allocation3 + $0x30] sm:$0xf0] %v924
        %930 = vst [vmem:[#allocation3 + $0x38] sm:$0xf0] %v925
        %931 = vst.msk [vmem:[#allocation3 + $0x40] sm:$0xf0] %vm851, %v923
        %v932 = vld [vmem:[#allocation2 + $0x4] sm:$0xff]
        %v933 = vld [vmem:[#allocation2 + $0xc] sm:$0xf]
        %v936 = vcombine.high %v932, %v932
        %937 = vrot.lane.b32.xlu0 %v932, 93
        %v938 = vpop.permute.xlu0 %937
        %939 = vrot.lane.b32.xlu0 %v936, 93
        %v940 = vpop.permute.xlu0 %939
        %941 = vrot.lane.b32.xlu0 %v933, 93
        %v942 = vpop.permute.xlu0 %941
        %v943 = vsel %vm445, %v938, %v940
        %v944 = vsel %vm445, %v940, %v942
        %948 = vst [vmem:[#allocation3 + $0x48] sm:$0xf] %v943
        %949 = vst [vmem:[#allocation3 + $0x50] sm:$0xf] %v944
        %950 = vst.msk [vmem:[#allocation3 + $0x58] sm:$0xf] %vm839, %v942
        %v951 = vld [vmem:[#allocation2 + $0x4] sm:$0xff]
        %v952 = vld [vmem:[#allocation2 + $0xc] sm:$0xf]
        %v955 = vcombine.low %v951, %v951
        %v956 = vcombine.low %v952, %v952
        %957 = vrot.lane.b32.xlu0 %v955, 92
        %v958 = vpop.permute.xlu0 %957
        %959 = vrot.lane.b32.xlu0 %v951, 92
        %v960 = vpop.permute.xlu0 %959
        %961 = vrot.lane.b32.xlu0 %v956, 92
        %v962 = vpop.permute.xlu0 %961
        %v963 = vsel %vm469, %v958, %v960
        %v964 = vsel %vm469, %v960, %v962
        %968 = vst [vmem:[#allocation3 + $0x48] sm:$0xf0] %v963
        %969 = vst [vmem:[#allocation3 + $0x50] sm:$0xf0] %v964
        %970 = vst.msk [vmem:[#allocation3 + $0x58] sm:$0xf0] %vm851, %v962
        %v971 = vld [vmem:[#allocation2 + $0x4] sm:$0xff]
        %v972 = vld [vmem:[#allocation2 + $0xc] sm:$0xf]
        %v975 = vcombine.high %v971, %v971
        %976 = vrot.lane.b32.xlu0 %v971, 91
        %v977 = vpop.permute.xlu0 %976
        %978 = vrot.lane.b32.xlu0 %v975, 91
        %v979 = vpop.permute.xlu0 %978
        %980 = vrot.lane.b32.xlu0 %v972, 91
        %v981 = vpop.permute.xlu0 %980
        %v982 = vsel %vm493, %v977, %v979
        %v983 = vsel %vm493, %v979, %v981
        %987 = vst [vmem:[#allocation3 + $0x60] sm:$0xf] %v982
        %988 = vst [vmem:[#allocation3 + $0x68] sm:$0xf] %v983
        %989 = vst.msk [vmem:[#allocation3 + $0x70] sm:$0xf] %vm839, %v981
        %v990 = vld [vmem:[%s5] sm:$0xff]
        %v991 = vld [vmem:[#allocation3] sm:$0xff]
        %v992 = vld [vmem:[#allocation3 + $0x8] sm:$0xff]
        %v993 = vld [vmem:[#allocation3 + $0x10] sm:$0xff]
        %v994 = vld [vmem:[#allocation3 + $0x18] sm:$0xff]
        %v995 = vld [vmem:[#allocation3 + $0x20] sm:$0xff]
        %v996 = vld [vmem:[#allocation3 + $0x28] sm:$0xff]
        %v997 = vld [vmem:[#allocation3 + $0x30] sm:$0xff]
        %v998 = vld [vmem:[#allocation3 + $0x38] sm:$0xff]
        %v999 = vld [vmem:[#allocation3 + $0x40] sm:$0xff]
        %v1000 = vld [vmem:[#allocation3 + $0x48] sm:$0xff]
        %v1001 = vld [vmem:[#allocation3 + $0x50] sm:$0xff]
        %v1002 = vld [vmem:[#allocation3 + $0x58] sm:$0xff]
        %v1003 = vld [vmem:[#allocation3 + $0x60] sm:$0xf]
        %v1004 = vld [vmem:[#allocation3 + $0x68] sm:$0xf]
        %v1005 = vld [vmem:[#allocation3 + $0x70] sm:$0xf]
        %v1006 = vld [vmem:[#allocation2 + $0x4] sm:$0xff]
        %v1007 = vld [vmem:[#allocation2 + $0xc] sm:$0xf]
        %v1008 = vld [vmem:[%s6] sm:$0xff]
        %1010 = vset.pattern.permute.xlu0 0
        %1011 = vperm.xlu0 %1010, %v1008
        %v1012 = vpop.permute.xlu0 %1011
        %v1015 = vsel %vm597, %v990, 0
        %v1018 = vsel %vm601, %v1003, 0
        %v1021 = vsel %vm601, %v1004, 0
        %v1024 = vsel %vm601, %v1005, 0
        %1026 = vmatprep.subr.mxu0 0.0
        %1027 = vmatpush1.msra.mxu0 0.0
        %1028 = vmatprep.subr.mxu0 0.0
        %1029 = vmatpush1.msra.mxu0 0.0
        %1030 = vmatprep.subr.mxu0 0.0
        %1031 = vmatpush1.msra.mxu0 0.0
        %1032 = vmatprep.subr.mxu0 0.0
        %1033 = vmatpush1.msra.mxu0 0.0
        %1034 = vmatprep.subr.mxu0 0.0
        %1035 = vmatpush1.msra.mxu0 0.0
        %1036 = vmatprep.subr.mxu0 0.0
        %1037 = vmatpush1.msra.mxu0 0.0
        %1038 = vmatprep.subr.mxu0 0.0
        %1039 = vmatpush1.msra.mxu0 0.0
        %1040 = vmatprep.subr.mxu0 0.0
        %1041 = vmatpush1.msra.mxu0 0.0
        %1042 = vmatprep.subr.mxu0 0.0
        %1043 = vmatpush1.msra.mxu0 0.0
        %1044 = vmatprep.subr.mxu0 0.0
        %1045 = vmatpush1.msra.mxu0 0.0
        %1046 = vmatprep.subr.mxu0 0.0
        %1047 = vmatpush1.msra.mxu0 0.0
        %1048 = vmatprep.subr.mxu0 %v1021
        %1049 = vmatpush1.msra.mxu0 %v1018
        %1050 = vmatprep.subr.mxu0 %v1001
        %1051 = vmatpush1.msra.mxu0 %v1000
        %1052 = vmatprep.subr.mxu0 %v998
        %1053 = vmatpush1.msra.mxu0 %v997
        %1054 = vmatprep.subr.mxu0 %v995
        %1055 = vmatpush1.msra.mxu0 %v994
        %1056 = vmatprep.subr.mxu0 %v992
        %1057 = vmatpush1.msra.mxu0 %v991
        %1058 = vmatprep.subr.mxu0 0.0
        %1059 = vmatpush2.msra.mxu0 0.0
        %1060 = vmatprep.subr.mxu0 0.0
        %1061 = vmatpush2.msra.mxu0 0.0
        %1062 = vmatprep.subr.mxu0 0.0
        %1063 = vmatpush2.msra.mxu0 0.0
        %1064 = vmatprep.subr.mxu0 0.0
        %1065 = vmatpush2.msra.mxu0 0.0
        %1066 = vmatprep.subr.mxu0 0.0
        %1067 = vmatpush2.msra.mxu0 0.0
        %1068 = vmatprep.subr.mxu0 0.0
        %1069 = vmatpush2.msra.mxu0 0.0
        %1070 = vmatprep.subr.mxu0 0.0
        %1071 = vmatpush2.msra.mxu0 0.0
        %1072 = vmatprep.subr.mxu0 0.0
        %1073 = vmatpush2.msra.mxu0 0.0
        %1074 = vmatprep.subr.mxu0 0.0
        %1075 = vmatpush2.msra.mxu0 0.0
        %1076 = vmatprep.subr.mxu0 0.0
        %1077 = vmatpush2.msra.mxu0 0.0
        %1078 = vmatprep.subr.mxu0 0.0
        %1079 = vmatpush2.msra.mxu0 0.0
        %1080 = vmatprep.subr.mxu0 0.0
        %1081 = vmatpush2.msra.mxu0 0.0
        %1082 = vmatprep.subr.mxu0 0.0
        %1083 = vmatpush2.msra.mxu0 0.0
        %1084 = vmatprep.subr.mxu0 0.0
        %1085 = vmatpush2.msra.mxu0 0.0
        %1086 = vmatprep.subr.mxu0 0.0
        %1087 = vmatpush2.msra.mxu0 0.0
        %1088 = vmatprep.subr.mxu0 0.0
        %1089 = vmatpush2.msra.mxu0 0.0
        %1090 = vmatprep.mubr.f32.mxu0 0.0
        %1091 = vmatmul.mubr.f32.gmra.mxu0 %v1015
        %v1092 = vpop.f32.mrf.mxu0
        %v1093 = vadd.f32 %v1012, %v1092
        %v1094 = vpop.f32.mrf.mxu0
        %v1095 = vadd.f32 %v1012, %v1094
        %1096 = vdwg.mxu0
        %1097 = vmatprep.subr.mxu0 0.0
        %1098 = vmatpush1.msra.mxu0 0.0
        %1099 = vmatprep.subr.mxu0 0.0
        %1100 = vmatpush1.msra.mxu0 0.0
        %1101 = vmatprep.subr.mxu0 0.0
        %1102 = vmatpush1.msra.mxu0 0.0
        %1103 = vmatprep.subr.mxu0 0.0
        %1104 = vmatpush1.msra.mxu0 0.0
        %1105 = vmatprep.subr.mxu0 0.0
        %1106 = vmatpush1.msra.mxu0 0.0
        %1107 = vmatprep.subr.mxu0 0.0
        %1108 = vmatpush1.msra.mxu0 0.0
        %1109 = vmatprep.subr.mxu0 0.0
        %1110 = vmatpush1.msra.mxu0 0.0
        %1111 = vmatprep.subr.mxu0 0.0
        %1112 = vmatpush1.msra.mxu0 0.0
        %1113 = vmatprep.subr.mxu0 0.0
        %1114 = vmatpush1.msra.mxu0 0.0
        %1115 = vmatprep.subr.mxu0 0.0
        %1116 = vmatpush1.msra.mxu0 0.0
        %1117 = vmatprep.subr.mxu0 0.0
        %1118 = vmatpush1.msra.mxu0 0.0
        %1119 = vmatprep.subr.mxu0 0.0
        %1120 = vmatpush1.msra.mxu0 %v1024
        %1121 = vmatprep.subr.mxu0 0.0
        %1122 = vmatpush1.msra.mxu0 %v1002
        %1123 = vmatprep.subr.mxu0 0.0
        %1124 = vmatpush1.msra.mxu0 %v999
        %1125 = vmatprep.subr.mxu0 0.0
        %1126 = vmatpush1.msra.mxu0 %v996
        %1127 = vmatprep.subr.mxu0 0.0
        %1128 = vmatpush1.msra.mxu0 %v993
        %1129 = vmatprep.subr.mxu0 0.0
        %1130 = vmatpush2.msra.mxu0 0.0
        %1131 = vmatprep.subr.mxu0 0.0
        %1132 = vmatpush2.msra.mxu0 0.0
        %1133 = vmatprep.subr.mxu0 0.0
        %1134 = vmatpush2.msra.mxu0 0.0
        %1135 = vmatprep.subr.mxu0 0.0
        %1136 = vmatpush2.msra.mxu0 0.0
        %1137 = vmatprep.subr.mxu0 0.0
        %1138 = vmatpush2.msra.mxu0 0.0
        %1139 = vmatprep.subr.mxu0 0.0
        %1140 = vmatpush2.msra.mxu0 0.0
        %1141 = vmatprep.subr.mxu0 0.0
        %1142 = vmatpush2.msra.mxu0 0.0
        %1143 = vmatprep.subr.mxu0 0.0
        %1144 = vmatpush2.msra.mxu0 0.0
        %1145 = vmatprep.subr.mxu0 0.0
        %1146 = vmatpush2.msra.mxu0 0.0
        %1147 = vmatprep.subr.mxu0 0.0
        %1148 = vmatpush2.msra.mxu0 0.0
        %1149 = vmatprep.subr.mxu0 0.0
        %1150 = vmatpush2.msra.mxu0 0.0
        %1151 = vmatprep.subr.mxu0 0.0
        %1152 = vmatpush2.msra.mxu0 0.0
        %1153 = vmatprep.subr.mxu0 0.0
        %1154 = vmatpush2.msra.mxu0 0.0
        %1155 = vmatprep.subr.mxu0 0.0
        %1156 = vmatpush2.msra.mxu0 0.0
        %1157 = vmatprep.subr.mxu0 0.0
        %1158 = vmatpush2.msra.mxu0 0.0
        %1159 = vmatprep.subr.mxu0 0.0
        %1160 = vmatpush2.msra.mxu0 0.0
        %1161 = vmatprep.mubr.f32.mxu0 0.0
        %1162 = vmatmul.mubr.f32.gmra.mxu0 %v1015
        %v1163 = vpop.f32.mrf.mxu0
        %v1164 = vadd.f32 %v1012, %v1163
        %v1165 = vpop.f32.mrf.mxu0
        %1166 = vdwg.mxu0
        %v1169 = vcombine.high %v1006, %v1006
        %v1171 = vcombine.low %v1006, %v1006
        %v1172 = vcombine.low %v1007, %v1007
        %v1175 = vsel %vm601, %v1006, %v1171
        %v1176 = vsel %vm601, %v1169, %v1006
        %v1177 = vsel %vm601, %v1007, %v1172
        %1181 = vrot.lane.b32.xlu0 %v1175, 110
        %v1182 = vpop.permute.xlu0 %1181
        %1183 = vrot.lane.b32.xlu0 %v1176, 110
        %v1184 = vpop.permute.xlu0 %1183
        %1185 = vrot.lane.b32.xlu0 %v1177, 110
        %v1186 = vpop.permute.xlu0 %1185
        %v1187 = vsel %vm401, %v1182, %v1184
        %v1188 = vsel %vm401, %v1184, %v1186
        %v1192 = vadd.f32 %v1093, %v1187
        %v1193 = vadd.f32 %v1095, %v1188
        %v1194 = vadd.f32 %v1164, %v1186
        %vm1195 = vcmp.gt.f32.partialorder %v1192, 0.0
        %vm1196 = vcmp.gt.f32.partialorder %v1193, 0.0
        %vm1197 = vcmp.gt.f32.partialorder %v1194, 0.0
        %v1198 = vld [vmem:[%s7] sm:$0xff]
        %1200 = vset.pattern.permute.xlu0 0
        %1201 = vperm.xlu0 %1200, %v1198
        %v1202 = vpop.permute.xlu0 %1201
        %v1204 = vmul.f32 %v1202, %v1192
        %v1205 = vmul.f32 %v1202, %v1193
        %v1206 = vmul.f32 %v1202, %v1194
        %v1207 = vsel %vm1195, %v1192, %v1204
        %v1208 = vsel %vm1196, %v1193, %v1205
        %v1209 = vsel %vm1197, %v1194, %v1206
        %vm1210 = vcmask 556032
        %v1211 = vsel %vm1210, %v1209, 0.0
        %1212 = vst [vmem:[%s352] sm:$0xff] %v1207
        %1213 = vst [vmem:[%s352 + $0x8] sm:$0xff] %v1208
        %1214 = vst [vmem:[%s352 + $0x10] sm:$0xff] %v1211
        %s1215 = sand.u32 %s227, 1
        %s1216 = scalar_lea.sflag [#allocation6], %s1215
        %s1217 = sand.u32 %s227, 1
        %s1218 = smul.addr %s1217, 24
        %s1219 = scalar_lea.vmem [#allocation7], %s1218
        // Predicated region
        $region61: #{tpu_custom_call.1} parent=51 // pred_check
          %p1220 = pneg %p237
        $region62: #{tpu_custom_call.1} parent=51 // pred_check_branch
          %1222 = sbr.rel (%p1220) target = $region64
        $region63: #{tpu_custom_call.1} parent=51 // pred_region
          %s1224 = ssub.s32 384, 384
          %1225 = vsyncadd %s1216, %s1224
          %s1226 = smul.addr %s30, 3
          %s1227 = smul.addr %s29, 3
          %s1228 = sadd.s32 %s1226, %s1227
          %s1229 = smul.addr %s1228, 128
          %s1230 = scalar_lea.hbm %s8, %s1229
          %s1232 = sshll.u32 %s1219, 4
          %s1233 = int_to_ptr.vmem [resolvable:$true] %s1232
          %1235 = dma.vmem_to_hbm [thread:$0]  %s1233, 384, %s1230, %s1216
        $region64: #{tpu_custom_call.1} parent=51 // pred_fallthru
          _
      $region52: #{tpu_custom_call.1} parent=5 // pred_fallthru
        _
      %p1236 = scmp.le.s32.totalorder 2, %s20
      // Predicated region
      $region65: #{tpu_custom_call.1} parent=5 // pred_check
        %p1237 = pneg %p1236
      $region66: #{tpu_custom_call.1} parent=5 // pred_check_branch
        %1239 = sbr.rel (%p1237) target = $region68
      $region67: #{tpu_custom_call.1} parent=5 // pred_region
        %s1240 = ssub.s32 %s20, 2
        // Predicated region
        $region69: #{tpu_custom_call.1} parent=67 // pred_check
          %p1241 = pneg %p243
        $region70: #{tpu_custom_call.1} parent=67 // pred_check_branch
          %1243 = sbr.rel (%p1241) target = $region72
        $region71: #{tpu_custom_call.1} parent=67 // pred_region
          %s1244 = sand.u32 %s228, 1
          %s1245 = scalar_lea.sflag [#allocation6], %s1244
          %s1246 = sand.u32 %s228, 1
          %s1247 = smul.addr %s1246, 24
          %s1248 = scalar_lea.vmem [#allocation7], %s1247
          %1249 = dma.done %s1245, 384
        $region72: #{tpu_custom_call.1} parent=67 // pred_fallthru
          _
      $region68: #{tpu_custom_call.1} parent=5 // pred_fallthru
        _
    $region6: #{tpu_custom_call.1} parent=1 // loop_footer
      %s24 = sadd.s32 1, %s20
    $region7: #{tpu_custom_call.1} parent=1 // loop_footer_branch
      %19 = sbr.rel target = $region3
    $region8: #{tpu_custom_call.1} parent=1 // loop_exit
      _
    %1250 = vsyncpa [#allocation5], 1
    %s1251 = scalar_lea.sflag [#allocation5], 1
    %1252 = vsyncpa %s1251, 1
    %1253 = vsyncpa [#allocation6], 1
    %s1254 = scalar_lea.sflag [#allocation6], 1
    %1255 = vsyncpa %s1254, 1

</llo_original>
